<compile_context>
chip_gen: v7x
topology: tpu7x:2x2x1
jax: 0.10.0
libtpu: 0.0.40
codegen_flags: <defaults>
</compile_context>

<pallas_src>
import jax
import jax.numpy as jnp
from jax import lax
from jax.experimental import pallas as pl
from jax.experimental.pallas import tpu as pltpu

THRESHOLD = 0.5   # BrainCog BaseNode / IFNode default threshold
DECAY = 0.99      # MutliInputSTDP trace decay
LANE = 128        # TPU lane width


def _round_up(x, m):
    return (x + m - 1) // m * m


def _self_connection_kernel(x_ref, w_ref, mem0_ref, x10_ref, trx0_ref, trx10_ref,
                            spk_ref, dw_ref, mem_ref, x1_ref, trx_ref, trx1_ref):
    t = pl.program_id(0)

    # First step: pull the initial recurrent state into the resident output blocks
    # and zero the dw accumulator.
    @pl.when(t == 0)
    def _init():
        mem_ref[...] = mem0_ref[...]
        x1_ref[...] = x10_ref[...]
        trx_ref[...] = trx0_ref[...]
        trx1_ref[...] = trx10_ref[...]
        dw_ref[...] = jnp.zeros_like(dw_ref)

    x = x_ref[0]          # [1, n_in_p]   this step's input spikes
    x1 = x1_ref[...]      # [1, n_out_p]  previous step's output spikes (old self.x1)

    # Fused synaptic current from both connections: one MXU matmul.
    xin = jnp.concatenate([x, x1], axis=-1)                       # [1, n_in_p + n_out_p]
    i = jnp.dot(xin, w_ref[...], preferred_element_type=jnp.float32)

    # IFNode: integrate -> fire -> hard reset.
    mem = mem_ref[...] + i
    spike = (mem - THRESHOLD > 0.0).astype(jnp.float32)
    mem_ref[...] = mem * (1.0 - spike)
    spk_ref[0] = spike
    x1_ref[...] = spike          # feedback state for the next step

    # STDP traces: trace_k = decay * trace_k + input_k (inputs are x and the OLD x1).
    trx = DECAY * trx_ref[...] + x
    trx1 = DECAY * trx1_ref[...] + x1
    trx_ref[...] = trx
    trx1_ref[...] = trx1

    # dw accumulation: [trace_x | trace_x1]^T @ spike, added into the resident dw block.
    trc = jnp.concatenate([trx, trx1], axis=-1)                   # [1, n_in_p + n_out_p]
    dw_ref[...] += lax.dot_general(
        trc, spike, (((0,), (0,)), ((), ())),
        preferred_element_type=jnp.float32)


def _forward_padded(x_p, w_cat, mem0, x10, trx0, trx10):
    T = x_p.shape[0]
    n_in_p = x_p.shape[-1]
    n_tot, n_out_p = w_cat.shape

    grid_spec = pltpu.PrefetchScalarGridSpec(
        num_scalar_prefetch=0,
        grid=(T,),
        in_specs=[
            pl.BlockSpec((1, 1, n_in_p), lambda t: (t, 0, 0)),   # x_t, streamed per step
            pl.BlockSpec((n_tot, n_out_p), lambda t: (0, 0)),    # [w1; w2], VMEM resident
            pl.BlockSpec((1, n_out_p), lambda t: (0, 0)),        # mem_0
            pl.BlockSpec((1, n_out_p), lambda t: (0, 0)),        # x1_0
            pl.BlockSpec((1, n_in_p), lambda t: (0, 0)),         # trace_x_0
            pl.BlockSpec((1, n_out_p), lambda t: (0, 0)),        # trace_x1_0
        ],
        out_specs=(
            pl.BlockSpec((1, 1, n_out_p), lambda t: (t, 0, 0)),  # spike_t, streamed per step
            pl.BlockSpec((n_tot, n_out_p), lambda t: (0, 0)),    # dw accumulator (resident)
            pl.BlockSpec((1, n_out_p), lambda t: (0, 0)),        # final mem
            pl.BlockSpec((1, n_out_p), lambda t: (0, 0)),        # final x1
            pl.BlockSpec((1, n_in_p), lambda t: (0, 0)),         # final trace_x
            pl.BlockSpec((1, n_out_p), lambda t: (0, 0)),        # final trace_x1
        ),
    )

    out_shapes = (
        jax.ShapeDtypeStruct((T, 1, n_out_p), jnp.float32),      # spikes
        jax.ShapeDtypeStruct((n_tot, n_out_p), jnp.float32),     # dw (summed over T)
        jax.ShapeDtypeStruct((1, n_out_p), jnp.float32),         # mem
        jax.ShapeDtypeStruct((1, n_out_p), jnp.float32),         # x1
        jax.ShapeDtypeStruct((1, n_in_p), jnp.float32),          # trace_x
        jax.ShapeDtypeStruct((1, n_out_p), jnp.float32),         # trace_x1
    )

    flops = 4 * T * n_tot * n_out_p          # forward matmul + dw outer product per step
    bytes_in = 4 * (x_p.size + w_cat.size + mem0.size + x10.size + trx0.size + trx10.size)
    bytes_out = 4 * (T * n_out_p + n_tot * n_out_p + 3 * n_out_p + n_in_p)
    cost = pl.CostEstimate(flops=flops, transcendentals=0,
                           bytes_accessed=bytes_in + bytes_out)

    return pl.pallas_call(
        _self_connection_kernel,
        grid_spec=grid_spec,
        out_shape=out_shapes,
        # In-place recurrent state: mem, x1, trace_x, trace_x1 alias their outputs.
        input_output_aliases={2: 2, 3: 3, 4: 4, 5: 5},
        compiler_params=pltpu.CompilerParams(
            dimension_semantics=("arbitrary",)),   # time axis carries state -> sequential
        cost_estimate=cost,
    )(x_p, w_cat, mem0, x10, trx0, trx10)


_forward_padded = jax.jit(_forward_padded)


def self_connection_area_forward(x_seq, w1, w2, x1=None, mem=None,
                                 trace_x=None, trace_x1=None):
    """Run T fused forward() steps of SelfConnectionArea.

    x_seq: [T, 1, n_in] input spikes (one module forward() per step, batch = 1
    per the module's [1, n_out] recurrent state contract).

    Returns (spikes [T, 1, n_out], dw1, dw2, mem, trace_x, trace_x1) where dw1/dw2
    are the SUM of the per-step STDP updates over the T steps and the trailing
    entries are the final recurrent state.  Call with T=1 for the exact per-call
    (spike, (dw1, dw2)) contract of the PyTorch module.
    """
    x_seq = jnp.asarray(x_seq, jnp.float32)
    T, B, n_in = x_seq.shape
    assert B == 1, "SelfConnectionArea keeps a [1, n_out] recurrent state (batch 1)."
    n_out = w1.shape[1]
    assert w1.shape == (n_in, n_out) and w2.shape == (n_out, n_out)

    if x1 is None:
        x1 = jnp.zeros((1, n_out), jnp.float32)
    if mem is None:
        mem = jnp.zeros((1, n_out), jnp.float32)
    if trace_x is None:
        trace_x = jnp.zeros((1, n_in), jnp.float32)
    if trace_x1 is None:
        trace_x1 = jnp.zeros((1, n_out), jnp.float32)

    n_in_p = _round_up(n_in, LANE)
    n_out_p = _round_up(n_out, LANE)

    # Lane-dense padding (exact: padded lanes/rows remain identically zero).
    x_p = jnp.pad(x_seq, ((0, 0), (0, 0), (0, n_in_p - n_in)))
    w1_p = jnp.pad(jnp.asarray(w1, jnp.float32),
                   ((0, n_in_p - n_in), (0, n_out_p - n_out)))
    w2_p = jnp.pad(jnp.asarray(w2, jnp.float32),
                   ((0, n_out_p - n_out), (0, n_out_p - n_out)))
    w_cat = jnp.concatenate([w1_p, w2_p], axis=0)        # [n_in_p + n_out_p, n_out_p]

    pad_out = ((0, 0), (0, n_out_p - n_out))
    pad_in = ((0, 0), (0, n_in_p - n_in))
    mem_p = jnp.pad(jnp.asarray(mem, jnp.float32), pad_out)
    x1_p = jnp.pad(jnp.asarray(x1, jnp.float32), pad_out)
    trx_p = jnp.pad(jnp.asarray(trace_x, jnp.float32), pad_in)
    trx1_p = jnp.pad(jnp.asarray(trace_x1, jnp.float32), pad_out)

    spk, dw, mem_o, x1_o, trx_o, trx1_o = _forward_padded(
        x_p, w_cat, mem_p, x1_p, trx_p, trx1_p)

    spikes = spk[:, :, :n_out]
    dw1 = dw[:n_in, :n_out]
    dw2 = dw[n_in_p:n_in_p + n_out, :n_out]
    return (spikes, dw1, dw2,
            mem_o[:, :n_out], trx_o[:, :n_in], trx1_o[:, :n_out])


if __name__ == "__main__":
    key = jax.random.PRNGKey(0)
    k_w1, k_w2, k_x = jax.random.split(key, 3)

    T, n_in, n_out = 8, 32, 16

    # Deterministic weights, quantized to multiples of 1/32 so the membrane sums are
    # exact in f32 and spike/threshold decisions are invariant to summation order.
    w1 = jnp.round(jax.random.normal(k_w1, (n_in, n_out), jnp.float32) * 16.0) / 32.0
    w2 = jnp.round(jax.random.normal(k_w2, (n_out, n_out), jnp.float32) * 16.0) / 32.0

    # Input spike train; initial state (x1, mem, traces) is zero (fresh module).
    x_seq = (jax.random.uniform(k_x, (T, 1, n_in)) > 0.5).astype(jnp.float32)

    outs = self_connection_area_forward(x_seq, w1, w2)
    outs = jax.block_until_ready(outs)

    # Pure-JAX per-step reference: T successive module forward() calls.
    def reference(x_seq, w1, w2):
        n_in, n_out = w1.shape
        x1 = jnp.zeros((1, n_out), jnp.float32)
        mem = jnp.zeros((1, n_out), jnp.float32)
        trx = jnp.zeros((1, n_in), jnp.float32)
        trx1 = jnp.zeros((1, n_out), jnp.float32)
        dw1 = jnp.zeros((n_in, n_out), jnp.float32)
        dw2 = jnp.zeros((n_out, n_out), jnp.float32)
        spikes = []
        for t in range(x_seq.shape[0]):
            x = x_seq[t]
            i = x @ w1 + x1 @ w2
            m = mem + i
            s = (m - THRESHOLD > 0.0).astype(jnp.float32)
            mem = m * (1.0 - s)
            trx = DECAY * trx + x
            trx1 = DECAY * trx1 + x1
            dw1 = dw1 + trx.T * s          # outer products (batch = 1)
            dw2 = dw2 + trx1.T * s
            x1 = s
            spikes.append(s)
        return jnp.stack(spikes), dw1, dw2, mem, trx, trx1

    refs = reference(x_seq, w1, w2)
    names = ["spikes", "dw1", "dw2", "mem", "trace_x", "trace_x1"]
    for name, o, r in zip(names, outs, refs):
        assert o.shape == r.shape, (name, o.shape, r.shape)
        assert o.dtype == r.dtype, (name, o.dtype, r.dtype)
        err = float(jnp.max(jnp.abs(o - r)))
        assert err < 1e-4, (name, err)

    # T=1 reproduces the module's exact per-forward() contract: (spike, (dw1, dw2)).
    s1, d1, d2, *_ = self_connection_area_forward(x_seq[:1], w1, w2)
    jax.block_until_ready((s1, d1, d2))
    assert s1.shape == (1, 1, n_out) and d1.shape == (n_in, n_out) and d2.shape == (n_out, n_out)

    print("KERNEL_OK")
</pallas_src>

<mosaic_0001>
module attributes {stable_mosaic.version = 11 : i64} {
  func.func @_self_connection_kernel(%arg0: i32, %arg1: memref<1x1x128xf32, #tpu.memory_space<vmem>>, %arg2: memref<256x128xf32, #tpu.memory_space<vmem>>, %arg3: memref<1x128xf32, #tpu.memory_space<vmem>>, %arg4: memref<1x128xf32, #tpu.memory_space<vmem>>, %arg5: memref<1x128xf32, #tpu.memory_space<vmem>>, %arg6: memref<1x128xf32, #tpu.memory_space<vmem>>, %arg7: memref<1x1x128xf32, #tpu.memory_space<vmem>>, %arg8: memref<256x128xf32, #tpu.memory_space<vmem>>, %arg9: memref<1x128xf32, #tpu.memory_space<vmem>>, %arg10: memref<1x128xf32, #tpu.memory_space<vmem>>, %arg11: memref<1x128xf32, #tpu.memory_space<vmem>>, %arg12: memref<1x128xf32, #tpu.memory_space<vmem>>) attributes {dimension_semantics = [#tpu.dimension_semantics<arbitrary>], iteration_bounds = array<i64: 8>, scalar_prefetch = 0 : i64, scratch_operands = 0 : i64, tpu.core_type = #tpu.core_type<tc>, window_params = [{transform_indices = @transform_0, window_bounds = array<i64: 1, 1, 128>}, {pipeline_mode = #tpu.pipeline_mode<synchronous>, transform_indices = @transform_1, window_bounds = array<i64: 256, 128>}, {pipeline_mode = #tpu.pipeline_mode<synchronous>, transform_indices = @transform_2, window_bounds = array<i64: 1, 128>}, {pipeline_mode = #tpu.pipeline_mode<synchronous>, transform_indices = @transform_3, window_bounds = array<i64: 1, 128>}, {pipeline_mode = #tpu.pipeline_mode<synchronous>, transform_indices = @transform_4, window_bounds = array<i64: 1, 128>}, {pipeline_mode = #tpu.pipeline_mode<synchronous>, transform_indices = @transform_5, window_bounds = array<i64: 1, 128>}, {transform_indices = @transform_6, window_bounds = array<i64: 1, 1, 128>}, {pipeline_mode = #tpu.pipeline_mode<synchronous>, transform_indices = @transform_7, window_bounds = array<i64: 256, 128>}, {pipeline_mode = #tpu.pipeline_mode<synchronous>, transform_indices = @transform_8, window_bounds = array<i64: 1, 128>}, {pipeline_mode = #tpu.pipeline_mode<synchronous>, transform_indices = @transform_9, window_bounds = array<i64: 1, 128>}, {pipeline_mode = #tpu.pipeline_mode<synchronous>, transform_indices = @transform_10, window_bounds = array<i64: 1, 128>}, {pipeline_mode = #tpu.pipeline_mode<synchronous>, transform_indices = @transform_11, window_bounds = array<i64: 1, 128>}]} {
    %c0_i32 = arith.constant 0 : i32
    %0 = arith.cmpi eq, %arg0, %c0_i32 : i32
    %1 = arith.extui %0 : i1 to i32
    %c0_i32_0 = arith.constant 0 : i32
    %2 = arith.cmpi ne, %1, %c0_i32_0 : i32
    scf.if %2 {
      %c0_34 = arith.constant 0 : index
      %c0_35 = arith.constant 0 : index
      %40 = vector.load %arg3[%c0_34, %c0_35] : memref<1x128xf32, #tpu.memory_space<vmem>>, vector<1x128xf32>
      %c0_36 = arith.constant 0 : index
      %c0_37 = arith.constant 0 : index
      %41 = vector.load %arg9[%c0_36, %c0_37] : memref<1x128xf32, #tpu.memory_space<vmem>>, vector<1x128xf32>
      tpu.vector_store %arg9[%c0_36, %c0_37], %40 {strides = array<i32>} : memref<1x128xf32, #tpu.memory_space<vmem>>, vector<1x128xf32>,
      %c0_38 = arith.constant 0 : index
      %c0_39 = arith.constant 0 : index
      %42 = vector.load %arg4[%c0_38, %c0_39] : memref<1x128xf32, #tpu.memory_space<vmem>>, vector<1x128xf32>
      %c0_40 = arith.constant 0 : index
      %c0_41 = arith.constant 0 : index
      %43 = vector.load %arg10[%c0_40, %c0_41] : memref<1x128xf32, #tpu.memory_space<vmem>>, vector<1x128xf32>
      tpu.vector_store %arg10[%c0_40, %c0_41], %42 {strides = array<i32>} : memref<1x128xf32, #tpu.memory_space<vmem>>, vector<1x128xf32>,
      %c0_42 = arith.constant 0 : index
      %c0_43 = arith.constant 0 : index
      %44 = vector.load %arg5[%c0_42, %c0_43] : memref<1x128xf32, #tpu.memory_space<vmem>>, vector<1x128xf32>
      %c0_44 = arith.constant 0 : index
      %c0_45 = arith.constant 0 : index
      %45 = vector.load %arg11[%c0_44, %c0_45] : memref<1x128xf32, #tpu.memory_space<vmem>>, vector<1x128xf32>
      tpu.vector_store %arg11[%c0_44, %c0_45], %44 {strides = array<i32>} : memref<1x128xf32, #tpu.memory_space<vmem>>, vector<1x128xf32>,
      %c0_46 = arith.constant 0 : index
      %c0_47 = arith.constant 0 : index
      %46 = vector.load %arg6[%c0_46, %c0_47] : memref<1x128xf32, #tpu.memory_space<vmem>>, vector<1x128xf32>
      %c0_48 = arith.constant 0 : index
      %c0_49 = arith.constant 0 : index
      %47 = vector.load %arg12[%c0_48, %c0_49] : memref<1x128xf32, #tpu.memory_space<vmem>>, vector<1x128xf32>
      tpu.vector_store %arg12[%c0_48, %c0_49], %46 {strides = array<i32>} : memref<1x128xf32, #tpu.memory_space<vmem>>, vector<1x128xf32>,
      %cst_50 = arith.constant 0.000000e+00 : f32
      %48 = vector.broadcast %cst_50 : f32 to vector<256x128xf32>
      %c0_51 = arith.constant 0 : index
      %c0_52 = arith.constant 0 : index
      %49 = vector.load %arg8[%c0_51, %c0_52] : memref<256x128xf32, #tpu.memory_space<vmem>>, vector<256x128xf32>
      tpu.vector_store %arg8[%c0_51, %c0_52], %48 {strides = array<i32>} : memref<256x128xf32, #tpu.memory_space<vmem>>, vector<256x128xf32>,
    } else {
    }
    %c0 = arith.constant 0 : index
    %c0_1 = arith.constant 0 : index
    %c0_2 = arith.constant 0 : index
    %3 = vector.load %arg1[%c0, %c0_1, %c0_2] : memref<1x1x128xf32, #tpu.memory_space<vmem>>, vector<1x1x128xf32>
    %4 = vector.shape_cast %3 : vector<1x1x128xf32> to vector<1x128xf32>
    %c0_3 = arith.constant 0 : index
    %c0_4 = arith.constant 0 : index
    %5 = vector.load %arg10[%c0_3, %c0_4] : memref<1x128xf32, #tpu.memory_space<vmem>>, vector<1x128xf32>
    %6 = tpu.concatenate %4, %5 in 1 : vector<1x128xf32>, vector<1x128xf32> -> vector<1x256xf32>
    %c0_5 = arith.constant 0 : index
    %c0_6 = arith.constant 0 : index
    %7 = vector.load %arg2[%c0_5, %c0_6] : memref<256x128xf32, #tpu.memory_space<vmem>>, vector<256x128xf32>
    %cst = arith.constant dense<0.000000e+00> : vector<1x128xf32>
    %8 = tpu.matmul %6, %7, %cst {dimension_numbers = #tpu.dot_dimension_numbers<[1], [0], [0], [1], [0, 0, 1, 1], [], []>} : vector<1x256xf32>, vector<256x128xf32>, vector<1x128xf32> -> vector<1x128xf32>
    %c0_7 = arith.constant 0 : index
    %c0_8 = arith.constant 0 : index
    %9 = vector.load %arg9[%c0_7, %c0_8] : memref<1x128xf32, #tpu.memory_space<vmem>>, vector<1x128xf32>
    %10 = arith.addf %9, %8 : vector<1x128xf32>
    %cst_9 = arith.constant 5.000000e-01 : f32
    %11 = vector.broadcast %cst_9 : f32 to vector<1x128xf32>
    %12 = arith.subf %10, %11 : vector<1x128xf32>
    %cst_10 = arith.constant 0.000000e+00 : f32
    %13 = vector.broadcast %cst_10 : f32 to vector<1x128xf32>
    %14 = arith.cmpf ogt, %12, %13 : vector<1x128xf32>
    %15 = arith.extui %14 : vector<1x128xi1> to vector<1x128xi32>
    %16 = arith.sitofp %15 : vector<1x128xi32> to vector<1x128xf32>
    %cst_11 = arith.constant 1.000000e+00 : f32
    %17 = vector.broadcast %cst_11 : f32 to vector<1x128xf32>
    %18 = arith.subf %17, %16 : vector<1x128xf32>
    %19 = arith.mulf %10, %18 : vector<1x128xf32>
    %c0_12 = arith.constant 0 : index
    %c0_13 = arith.constant 0 : index
    %20 = vector.load %arg9[%c0_12, %c0_13] : memref<1x128xf32, #tpu.memory_space<vmem>>, vector<1x128xf32>
    tpu.vector_store %arg9[%c0_12, %c0_13], %19 {strides = array<i32>} : memref<1x128xf32, #tpu.memory_space<vmem>>, vector<1x128xf32>,
    %c0_14 = arith.constant 0 : index
    %c0_15 = arith.constant 0 : index
    %c0_16 = arith.constant 0 : index
    %21 = vector.load %arg7[%c0_14, %c0_15, %c0_16] : memref<1x1x128xf32, #tpu.memory_space<vmem>>, vector<1x1x128xf32>
    %22 = vector.shape_cast %21 : vector<1x1x128xf32> to vector<1x128xf32>
    %23 = vector.shape_cast %16 : vector<1x128xf32> to vector<1x1x128xf32>
    tpu.vector_store %arg7[%c0_14, %c0_15, %c0_16], %23 {strides = array<i32>} : memref<1x1x128xf32, #tpu.memory_space<vmem>>, vector<1x1x128xf32>,
    %c0_17 = arith.constant 0 : index
    %c0_18 = arith.constant 0 : index
    %24 = vector.load %arg10[%c0_17, %c0_18] : memref<1x128xf32, #tpu.memory_space<vmem>>, vector<1x128xf32>
    tpu.vector_store %arg10[%c0_17, %c0_18], %16 {strides = array<i32>} : memref<1x128xf32, #tpu.memory_space<vmem>>, vector<1x128xf32>,
    %c0_19 = arith.constant 0 : index
    %c0_20 = arith.constant 0 : index
    %25 = vector.load %arg11[%c0_19, %c0_20] : memref<1x128xf32, #tpu.memory_space<vmem>>, vector<1x128xf32>
    %cst_21 = arith.constant 9.900000e-01 : f32
    %26 = vector.broadcast %cst_21 : f32 to vector<1x128xf32>
    %27 = arith.mulf %26, %25 : vector<1x128xf32>
    %28 = arith.addf %27, %4 : vector<1x128xf32>
    %c0_22 = arith.constant 0 : index
    %c0_23 = arith.constant 0 : index
    %29 = vector.load %arg12[%c0_22, %c0_23] : memref<1x128xf32, #tpu.memory_space<vmem>>, vector<1x128xf32>
    %cst_24 = arith.constant 9.900000e-01 : f32
    %30 = vector.broadcast %cst_24 : f32 to vector<1x128xf32>
    %31 = arith.mulf %30, %29 : vector<1x128xf32>
    %32 = arith.addf %31, %5 : vector<1x128xf32>
    %c0_25 = arith.constant 0 : index
    %c0_26 = arith.constant 0 : index
    %33 = vector.load %arg11[%c0_25, %c0_26] : memref<1x128xf32, #tpu.memory_space<vmem>>, vector<1x128xf32>
    tpu.vector_store %arg11[%c0_25, %c0_26], %28 {strides = array<i32>} : memref<1x128xf32, #tpu.memory_space<vmem>>, vector<1x128xf32>,
    %c0_27 = arith.constant 0 : index
    %c0_28 = arith.constant 0 : index
    %34 = vector.load %arg12[%c0_27, %c0_28] : memref<1x128xf32, #tpu.memory_space<vmem>>, vector<1x128xf32>
    tpu.vector_store %arg12[%c0_27, %c0_28], %32 {strides = array<i32>} : memref<1x128xf32, #tpu.memory_space<vmem>>, vector<1x128xf32>,
    %35 = tpu.concatenate %28, %32 in 1 : vector<1x128xf32>, vector<1x128xf32> -> vector<1x256xf32>
    %c0_29 = arith.constant 0 : index
    %c0_30 = arith.constant 0 : index
    %36 = vector.load %arg8[%c0_29, %c0_30] : memref<256x128xf32, #tpu.memory_space<vmem>>, vector<256x128xf32>
    %cst_31 = arith.constant dense<0.000000e+00> : vector<256x128xf32>
    %37 = tpu.matmul %35, %16, %cst_31 {dimension_numbers = #tpu.dot_dimension_numbers<[0], [0], [1], [1], [0, 1, 1, 1], [], []>} : vector<1x256xf32>, vector<1x128xf32>, vector<256x128xf32> -> vector<256x128xf32>
    %38 = arith.addf %36, %37 : vector<256x128xf32>
    %c0_32 = arith.constant 0 : index
    %c0_33 = arith.constant 0 : index
    %39 = vector.load %arg8[%c0_32, %c0_33] : memref<256x128xf32, #tpu.memory_space<vmem>>, vector<256x128xf32>
    tpu.vector_store %arg8[%c0_32, %c0_33], %38 {strides = array<i32>} : memref<256x128xf32, #tpu.memory_space<vmem>>, vector<256x128xf32>,
    return
  }
  func.func @transform_0(%arg0: i32) -> (i32, i32, i32) {
    %c0_i32 = arith.constant 0 : i32
    %c0_i32_0 = arith.constant 0 : i32
    %c0_i32_1 = arith.constant 0 : i32
    return %arg0, %c0_i32, %c0_i32_0 : i32, i32, i32
  }
  func.func @transform_1(%arg0: i32) -> (i32, i32) {
    %c0_i32 = arith.constant 0 : i32
    %c0_i32_0 = arith.constant 0 : i32
    %c0_i32_1 = arith.constant 0 : i32
    return %c0_i32, %c0_i32_0 : i32, i32
  }
  func.func @transform_2(%arg0: i32) -> (i32, i32) {
    %c0_i32 = arith.constant 0 : i32
    %c0_i32_0 = arith.constant 0 : i32
    %c0_i32_1 = arith.constant 0 : i32
    return %c0_i32, %c0_i32_0 : i32, i32
  }
  func.func @transform_3(%arg0: i32) -> (i32, i32) {
    %c0_i32 = arith.constant 0 : i32
    %c0_i32_0 = arith.constant 0 : i32
    %c0_i32_1 = arith.constant 0 : i32
    return %c0_i32, %c0_i32_0 : i32, i32
  }
  func.func @transform_4(%arg0: i32) -> (i32, i32) {
    %c0_i32 = arith.constant 0 : i32
    %c0_i32_0 = arith.constant 0 : i32
    %c0_i32_1 = arith.constant 0 : i32
    return %c0_i32, %c0_i32_0 : i32, i32
  }
  func.func @transform_5(%arg0: i32) -> (i32, i32) {
    %c0_i32 = arith.constant 0 : i32
    %c0_i32_0 = arith.constant 0 : i32
    %c0_i32_1 = arith.constant 0 : i32
    return %c0_i32, %c0_i32_0 : i32, i32
  }
  func.func @transform_6(%arg0: i32) -> (i32, i32, i32) {
    %c0_i32 = arith.constant 0 : i32
    %c0_i32_0 = arith.constant 0 : i32
    %c0_i32_1 = arith.constant 0 : i32
    return %arg0, %c0_i32, %c0_i32_0 : i32, i32, i32
  }
  func.func @transform_7(%arg0: i32) -> (i32, i32) {
    %c0_i32 = arith.constant 0 : i32
    %c0_i32_0 = arith.constant 0 : i32
    %c0_i32_1 = arith.constant 0 : i32
    return %c0_i32, %c0_i32_0 : i32, i32
  }
  func.func @transform_8(%arg0: i32) -> (i32, i32) {
    %c0_i32 = arith.constant 0 : i32
    %c0_i32_0 = arith.constant 0 : i32
    %c0_i32_1 = arith.constant 0 : i32
    return %c0_i32, %c0_i32_0 : i32, i32
  }
  func.func @transform_9(%arg0: i32) -> (i32, i32) {
    %c0_i32 = arith.constant 0 : i32
    %c0_i32_0 = arith.constant 0 : i32
    %c0_i32_1 = arith.constant 0 : i32
    return %c0_i32, %c0_i32_0 : i32, i32
  }
  func.func @transform_10(%arg0: i32) -> (i32, i32) {
    %c0_i32 = arith.constant 0 : i32
    %c0_i32_0 = arith.constant 0 : i32
    %c0_i32_1 = arith.constant 0 : i32
    return %c0_i32, %c0_i32_0 : i32, i32
  }
  func.func @transform_11(%arg0: i32) -> (i32, i32) {
    %c0_i32 = arith.constant 0 : i32
    %c0_i32_0 = arith.constant 0 : i32
    %c0_i32_1 = arith.constant 0 : i32
    return %c0_i32, %c0_i32_0 : i32, i32
  }
}

</mosaic_0001>

<llo_original>
// kernel: _forward_padded.1
$region0: #{_forward_padded.1}
  #allocation0 [shape = 'u32[]', space=smem, size = 0x4, offset = 0x4, fixed_abs, tag = 'smem constant byte address 0x4 - core index']
  #allocation1 [shape = 'u32[144,128]{1,0:T(1,128)}', space=vmem, size = 0x12000, scoped, tag = 'internal scratch']
  %s0 = inlined_call_operand.vmem [shape: f32[8,1,128], index: 0, kind: input, shape index: {}]
  %s1 = inlined_call_operand.hbm [shape: f32[256,128], index: 1, kind: input, shape index: {}]
  %s2 = inlined_call_operand.hbm [shape: f32[1,128], index: 2, kind: input, shape index: {}, may-alias: {2,8}]
  %s3 = inlined_call_operand.hbm [shape: f32[1,128], index: 3, kind: input, shape index: {}, may-alias: {3,9}]
  %s4 = inlined_call_operand.hbm [shape: f32[1,128], index: 4, kind: input, shape index: {}, may-alias: {4,10}]
  %s5 = inlined_call_operand.hbm [shape: f32[1,128], index: 5, kind: input, shape index: {}, may-alias: {5,11}]
  %s6 = inlined_call_operand.hbm [shape: f32[8,1,128], index: 6, kind: output, shape index: {0}]
  %s7 = inlined_call_operand.hbm [shape: f32[256,128], index: 7, kind: output, shape index: {1}]
  %s8 = inlined_call_operand.hbm [shape: f32[1,128], index: 8, kind: output, shape index: {2}, may-alias: {2,8}]
  %s9 = inlined_call_operand.hbm [shape: f32[1,128], index: 9, kind: output, shape index: {3}, may-alias: {3,9}]
  %s10 = inlined_call_operand.hbm [shape: f32[1,128], index: 10, kind: output, shape index: {4}, may-alias: {4,10}]
  %s11 = inlined_call_operand.hbm [shape: f32[1,128], index: 11, kind: output, shape index: {5}, may-alias: {5,11}]
  %12 = xla_tuple %s6, %s7, %s8, %s9, %s10, %s11
  %s13 = sld [smem:[#allocation0]]
  $region121: #{_forward_padded.1} parent=0
    _
  %s15 = ssub.s32 1, %s13
  %s16 = scalar_select 0, %s15, %s13
  $region1: #{_forward_padded.1} parent=0
    #allocation2 [shape = 'u8[131072]{0}', space=vmem, size = 0x20000, scoped, tag = 'input window, operand 1, single buffered']
    #allocation3 [shape = 's32[2]{0}', space=sflag, size = 0x8, scoped, tag = 'scoped memory for _forward_padded.1']
    #allocation4 [shape = 's32[2]{0}', space=sflag, size = 0x8, scoped, tag = 'scoped memory for _forward_padded.1']
    #allocation5 [shape = 'u8[512]{0}', space=vmem, size = 0x400, scoped, tag = 'input window, operand 2, single buffered']
    #allocation6 [shape = 's32[1]{0}', space=sflag, size = 0x4, scoped, tag = 'scoped memory for _forward_padded.1']
    #allocation7 [shape = 'u8[512]{0}', space=vmem, size = 0x400, scoped, tag = 'input window, operand 3, single buffered']
    #allocation8 [shape = 'u8[512]{0}', space=vmem, size = 0x400, scoped, tag = 'input window, operand 4, single buffered']
    #allocation9 [shape = 's32[1]{0}', space=sflag, size = 0x4, scoped, tag = 'scoped memory for _forward_padded.1']
    #allocation10 [shape = 'u8[512]{0}', space=vmem, size = 0x400, scoped, tag = 'input window, operand 5, single buffered']
    #allocation11 [shape = 'u8[1024]{0}', space=vmem, size = 0x400, scoped, tag = 'output window, operand 0']
    #allocation12 [shape = 'u8[131072]{0}', space=vmem, size = 0x20000, scoped, tag = 'output window, operand 1, single buffered']
    #allocation13 [shape = 's32[1]{0}', space=sflag, size = 0x4, scoped, tag = 'scoped memory for _forward_padded.1']
    #allocation14 [shape = 'u8[512]{0}', space=vmem, size = 0x400, scoped, tag = 'output window, operand 2, single buffered']
    #allocation15 [shape = 'u8[512]{0}', space=vmem, size = 0x400, scoped, tag = 'output window, operand 3, single buffered']
    #allocation16 [shape = 's32[1]{0}', space=sflag, size = 0x4, scoped, tag = 'scoped memory for _forward_padded.1']
    #allocation17 [shape = 'u8[512]{0}', space=vmem, size = 0x400, scoped, tag = 'output window, operand 4, single buffered']
    #allocation18 [shape = 'u8[512]{0}', space=vmem, size = 0x400, scoped, tag = 'output window, operand 5, single buffered']
    #allocation19 [shape = 's32[1]{0}', space=sflag, size = 0x4, scoped, tag = 'scoped memory for _forward_padded.1']
    %17 = vsyncpa [#allocation3], 0
    %18 = vsyncpa [#allocation6], 0
    %19 = vsyncpa [#allocation9], 0
    %20 = vsyncpa [#allocation4], 0
    %s21 = scalar_lea.sflag [#allocation4], 1
    %22 = vsyncpa %s21, 0
    %23 = vsyncpa [#allocation13], 0
    %24 = vsyncpa [#allocation16], 0
    %25 = vsyncpa [#allocation19], 0
    loop: start=0, step=1, limit=10
    $region2: #{_forward_padded.1} parent=1 // loop_pre_header
      _
    $region3: #{_forward_padded.1} parent=1 // loop_header
      %s27 = sphi 0, %s31
      %p28 = scmp.ge.s32.totalorder %s27, 10
      %s37 = sphi 0, %s39
      %s40 = sphi 0, %s37
      %s41 = sphi 0, %s40
      %s57 = sphi 0, %s41
      %s61 = sphi 0, %s61
      %s63 = sphi 0, %s61
      %s64 = sphi 0, %s63
      %s78 = sphi 0, %s64
      %s82 = sphi 0, %s82
      %s84 = sphi 0, %s82
      %s85 = sphi 0, %s84
      %s99 = sphi 0, %s85
      %s103 = sphi 0, %s103
      %s105 = sphi 0, %s103
      %s106 = sphi 0, %s105
      %s120 = sphi 0, %s106
      %s124 = sphi 0, %s124
      %s126 = sphi 0, %s124
      %s127 = sphi 0, %s126
      %s141 = sphi 0, %s127
      %s145 = sphi 0, %s145
      %s147 = sphi 0, %s145
      %s148 = sphi 0, %s147
      %s162 = sphi 0, %s148
      %s168 = sphi 0, %s170
      %s171 = sphi 0, %s168
      %s172 = sphi 0, %s171
      %s188 = sphi 0, %s172
      %s192 = sphi 0, %s192
      %s194 = sphi 0, %s192
      %s195 = sphi 0, %s194
      %s209 = sphi 0, %s195
      %s213 = sphi 0, %s213
      %s215 = sphi 0, %s213
      %s216 = sphi 0, %s215
      %s230 = sphi 0, %s216
      %s234 = sphi 0, %s234
      %s236 = sphi 0, %s234
      %s237 = sphi 0, %s236
      %s251 = sphi 0, %s237
      %s255 = sphi 0, %s255
      %s257 = sphi 0, %s255
      %s258 = sphi 0, %s257
      %s272 = sphi 0, %s258
      %s276 = sphi 0, %s276
      %s278 = sphi 0, %s276
      %s279 = sphi 0, %s278
      %s293 = sphi 0, %s279
    $region4: #{_forward_padded.1} parent=1 // loop_header_branch
      %30 = sbr.rel (%p28) target = $region8
    $region5: #{_forward_padded.1} parent=1 // loop_body
      %s32 = ssub.s32 %s27, 1
      %s33 = ssub.s32 %s27, 2
      %s34 = sadd.s32 %s27, 1
      %s35 = ssub.s32 %s27, %s34
      %p36 = scmp.eq.s32.totalorder %s35, 0
      %s38 = sadd.s32 %s37, 1
      %s39 = scalar_select %p36, %s37, %s38
      %p42 = pneg %p36
      %p43 = scmp.eq.s32.totalorder %s27, 7
      %p44 = por %p42, %p43
      %p45 = scmp.ne.s32.totalorder %s37, %s40
      %p46 = scmp.eq.s32.totalorder %s27, 0
      %p47 = por %p45, %p46
      %p48 = scmp.ne.s32.totalorder %s37, %s40
      %p49 = scmp.eq.s32.totalorder %s32, 7
      %p50 = por %p48, %p49
      %p51 = scmp.ne.s32.totalorder %s40, %s41
      %p52 = scmp.eq.s32.totalorder %s32, 0
      %p53 = por %p51, %p52
      %p54 = scmp.ne.s32.totalorder %s40, %s41
      %p55 = scmp.eq.s32.totalorder %s33, 7
      %p56 = por %p54, %p55
      %p58 = scmp.ne.s32.totalorder %s41, %s57
      %p59 = scmp.eq.s32.totalorder %s33, 0
      %p60 = por %p58, %p59
      %s62 = sadd.s32 %s61, 1
      %p65 = scmp.eq.s32.totalorder %s27, 7
      %p66 = scmp.ne.s32.totalorder %s61, %s63
      %p67 = scmp.eq.s32.totalorder %s27, 0
      %p68 = por %p66, %p67
      %p69 = scmp.ne.s32.totalorder %s61, %s63
      %p70 = scmp.eq.s32.totalorder %s32, 7
      %p71 = por %p69, %p70
      %p72 = scmp.ne.s32.totalorder %s63, %s64
      %p73 = scmp.eq.s32.totalorder %s32, 0
      %p74 = por %p72, %p73
      %p75 = scmp.ne.s32.totalorder %s63, %s64
      %p76 = scmp.eq.s32.totalorder %s33, 7
      %p77 = por %p75, %p76
      %p79 = scmp.ne.s32.totalorder %s64, %s78
      %p80 = scmp.eq.s32.totalorder %s33, 0
      %p81 = por %p79, %p80
      %s83 = sadd.s32 %s82, 1
      %p86 = scmp.eq.s32.totalorder %s27, 7
      %p87 = scmp.ne.s32.totalorder %s82, %s84
      %p88 = scmp.eq.s32.totalorder %s27, 0
      %p89 = por %p87, %p88
      %p90 = scmp.ne.s32.totalorder %s82, %s84
      %p91 = scmp.eq.s32.totalorder %s32, 7
      %p92 = por %p90, %p91
      %p93 = scmp.ne.s32.totalorder %s84, %s85
      %p94 = scmp.eq.s32.totalorder %s32, 0
      %p95 = por %p93, %p94
      %p96 = scmp.ne.s32.totalorder %s84, %s85
      %p97 = scmp.eq.s32.totalorder %s33, 7
      %p98 = por %p96, %p97
      %p100 = scmp.ne.s32.totalorder %s85, %s99
      %p101 = scmp.eq.s32.totalorder %s33, 0
      %p102 = por %p100, %p101
      %s104 = sadd.s32 %s103, 1
      %p107 = scmp.eq.s32.totalorder %s27, 7
      %p108 = scmp.ne.s32.totalorder %s103, %s105
      %p109 = scmp.eq.s32.totalorder %s27, 0
      %p110 = por %p108, %p109
      %p111 = scmp.ne.s32.totalorder %s103, %s105
      %p112 = scmp.eq.s32.totalorder %s32, 7
      %p113 = por %p111, %p112
      %p114 = scmp.ne.s32.totalorder %s105, %s106
      %p115 = scmp.eq.s32.totalorder %s32, 0
      %p116 = por %p114, %p115
      %p117 = scmp.ne.s32.totalorder %s105, %s106
      %p118 = scmp.eq.s32.totalorder %s33, 7
      %p119 = por %p117, %p118
      %p121 = scmp.ne.s32.totalorder %s106, %s120
      %p122 = scmp.eq.s32.totalorder %s33, 0
      %p123 = por %p121, %p122
      %s125 = sadd.s32 %s124, 1
      %p128 = scmp.eq.s32.totalorder %s27, 7
      %p129 = scmp.ne.s32.totalorder %s124, %s126
      %p130 = scmp.eq.s32.totalorder %s27, 0
      %p131 = por %p129, %p130
      %p132 = scmp.ne.s32.totalorder %s124, %s126
      %p133 = scmp.eq.s32.totalorder %s32, 7
      %p134 = por %p132, %p133
      %p135 = scmp.ne.s32.totalorder %s126, %s127
      %p136 = scmp.eq.s32.totalorder %s32, 0
      %p137 = por %p135, %p136
      %p138 = scmp.ne.s32.totalorder %s126, %s127
      %p139 = scmp.eq.s32.totalorder %s33, 7
      %p140 = por %p138, %p139
      %p142 = scmp.ne.s32.totalorder %s127, %s141
      %p143 = scmp.eq.s32.totalorder %s33, 0
      %p144 = por %p142, %p143
      %s146 = sadd.s32 %s145, 1
      %p149 = scmp.eq.s32.totalorder %s27, 7
      %p150 = scmp.ne.s32.totalorder %s145, %s147
      %p151 = scmp.eq.s32.totalorder %s27, 0
      %p152 = por %p150, %p151
      %p153 = scmp.ne.s32.totalorder %s145, %s147
      %p154 = scmp.eq.s32.totalorder %s32, 7
      %p155 = por %p153, %p154
      %p156 = scmp.ne.s32.totalorder %s147, %s148
      %p157 = scmp.eq.s32.totalorder %s32, 0
      %p158 = por %p156, %p157
      %p159 = scmp.ne.s32.totalorder %s147, %s148
      %p160 = scmp.eq.s32.totalorder %s33, 7
      %p161 = por %p159, %p160
      %p163 = scmp.ne.s32.totalorder %s148, %s162
      %p164 = scmp.eq.s32.totalorder %s33, 0
      %p165 = por %p163, %p164
      %s166 = ssub.s32 %s27, %s34
      %p167 = scmp.eq.s32.totalorder %s166, 0
      %s169 = sadd.s32 %s168, 1
      %s170 = scalar_select %p167, %s168, %s169
      %p173 = pneg %p167
      %p174 = scmp.eq.s32.totalorder %s27, 7
      %p175 = por %p173, %p174
      %p176 = scmp.ne.s32.totalorder %s168, %s171
      %p177 = scmp.eq.s32.totalorder %s27, 0
      %p178 = por %p176, %p177
      %p179 = scmp.ne.s32.totalorder %s168, %s171
      %p180 = scmp.eq.s32.totalorder %s32, 7
      %p181 = por %p179, %p180
      %p182 = scmp.ne.s32.totalorder %s171, %s172
      %p183 = scmp.eq.s32.totalorder %s32, 0
      %p184 = por %p182, %p183
      %p185 = scmp.ne.s32.totalorder %s171, %s172
      %p186 = scmp.eq.s32.totalorder %s33, 7
      %p187 = por %p185, %p186
      %p189 = scmp.ne.s32.totalorder %s172, %s188
      %p190 = scmp.eq.s32.totalorder %s33, 0
      %p191 = por %p189, %p190
      %s193 = sadd.s32 %s192, 1
      %p196 = scmp.eq.s32.totalorder %s27, 7
      %p197 = scmp.ne.s32.totalorder %s192, %s194
      %p198 = scmp.eq.s32.totalorder %s27, 0
      %p199 = por %p197, %p198
      %p200 = scmp.ne.s32.totalorder %s192, %s194
      %p201 = scmp.eq.s32.totalorder %s32, 7
      %p202 = por %p200, %p201
      %p203 = scmp.ne.s32.totalorder %s194, %s195
      %p204 = scmp.eq.s32.totalorder %s32, 0
      %p205 = por %p203, %p204
      %p206 = scmp.ne.s32.totalorder %s194, %s195
      %p207 = scmp.eq.s32.totalorder %s33, 7
      %p208 = por %p206, %p207
      %p210 = scmp.ne.s32.totalorder %s195, %s209
      %p211 = scmp.eq.s32.totalorder %s33, 0
      %p212 = por %p210, %p211
      %s214 = sadd.s32 %s213, 1
      %p217 = scmp.eq.s32.totalorder %s27, 7
      %p218 = scmp.ne.s32.totalorder %s213, %s215
      %p219 = scmp.eq.s32.totalorder %s27, 0
      %p220 = por %p218, %p219
      %p221 = scmp.ne.s32.totalorder %s213, %s215
      %p222 = scmp.eq.s32.totalorder %s32, 7
      %p223 = por %p221, %p222
      %p224 = scmp.ne.s32.totalorder %s215, %s216
      %p225 = scmp.eq.s32.totalorder %s32, 0
      %p226 = por %p224, %p225
      %p227 = scmp.ne.s32.totalorder %s215, %s216
      %p228 = scmp.eq.s32.totalorder %s33, 7
      %p229 = por %p227, %p228
      %p231 = scmp.ne.s32.totalorder %s216, %s230
      %p232 = scmp.eq.s32.totalorder %s33, 0
      %p233 = por %p231, %p232
      %s235 = sadd.s32 %s234, 1
      %p238 = scmp.eq.s32.totalorder %s27, 7
      %p239 = scmp.ne.s32.totalorder %s234, %s236
      %p240 = scmp.eq.s32.totalorder %s27, 0
      %p241 = por %p239, %p240
      %p242 = scmp.ne.s32.totalorder %s234, %s236
      %p243 = scmp.eq.s32.totalorder %s32, 7
      %p244 = por %p242, %p243
      %p245 = scmp.ne.s32.totalorder %s236, %s237
      %p246 = scmp.eq.s32.totalorder %s32, 0
      %p247 = por %p245, %p246
      %p248 = scmp.ne.s32.totalorder %s236, %s237
      %p249 = scmp.eq.s32.totalorder %s33, 7
      %p250 = por %p248, %p249
      %p252 = scmp.ne.s32.totalorder %s237, %s251
      %p253 = scmp.eq.s32.totalorder %s33, 0
      %p254 = por %p252, %p253
      %s256 = sadd.s32 %s255, 1
      %p259 = scmp.eq.s32.totalorder %s27, 7
      %p260 = scmp.ne.s32.totalorder %s255, %s257
      %p261 = scmp.eq.s32.totalorder %s27, 0
      %p262 = por %p260, %p261
      %p263 = scmp.ne.s32.totalorder %s255, %s257
      %p264 = scmp.eq.s32.totalorder %s32, 7
      %p265 = por %p263, %p264
      %p266 = scmp.ne.s32.totalorder %s257, %s258
      %p267 = scmp.eq.s32.totalorder %s32, 0
      %p268 = por %p266, %p267
      %p269 = scmp.ne.s32.totalorder %s257, %s258
      %p270 = scmp.eq.s32.totalorder %s33, 7
      %p271 = por %p269, %p270
      %p273 = scmp.ne.s32.totalorder %s258, %s272
      %p274 = scmp.eq.s32.totalorder %s33, 0
      %p275 = por %p273, %p274
      %s277 = sadd.s32 %s276, 1
      %p280 = scmp.eq.s32.totalorder %s27, 7
      %p281 = scmp.ne.s32.totalorder %s276, %s278
      %p282 = scmp.eq.s32.totalorder %s27, 0
      %p283 = por %p281, %p282
      %p284 = scmp.ne.s32.totalorder %s276, %s278
      %p285 = scmp.eq.s32.totalorder %s32, 7
      %p286 = por %p284, %p285
      %p287 = scmp.ne.s32.totalorder %s278, %s279
      %p288 = scmp.eq.s32.totalorder %s32, 0
      %p289 = por %p287, %p288
      %p290 = scmp.ne.s32.totalorder %s278, %s279
      %p291 = scmp.eq.s32.totalorder %s33, 7
      %p292 = por %p290, %p291
      %p294 = scmp.ne.s32.totalorder %s279, %s293
      %p295 = scmp.eq.s32.totalorder %s33, 0
      %p296 = por %p294, %p295
      %p297 = scmp.le.s32.totalorder 1, %s27
      %p298 = scmp.lt.s32.totalorder %s27, 9
      %p299 = pnand %p297, %p298
      %p300 = pneg %p299
      // Predicated region
      $region9: #{_forward_padded.1} parent=5 // pred_check
        _
      $region10: #{_forward_padded.1} parent=5 // pred_check_branch
        %302 = sbr.rel (%p299) target = $region12
      $region11: #{_forward_padded.1} parent=5 // pred_region
        %s303 = ssub.s32 %s27, 1
        // Predicated region
        $region13: #{_forward_padded.1} parent=11 // pred_check
          %p304 = pneg %p74
        $region14: #{_forward_padded.1} parent=11 // pred_check_branch
          %306 = sbr.rel (%p304) target = $region16
        $region15: #{_forward_padded.1} parent=11 // pred_region
          %s308 = ssub.s32 4096, 4096
          %309 = vsyncadd [#allocation3], %s308
          %s310 = sshll.u32 [#allocation2], 4
          %s311 = int_to_ptr.vmem [resolvable:$true] %s310
          %316 = dma.hbm_to_vmem [thread:$0]  %s1, 4096, %s311, [#allocation3], 128, 128, 8
        $region16: #{_forward_padded.1} parent=11 // pred_fallthru
          _
        // Predicated region
        $region17: #{_forward_padded.1} parent=11 // pred_check
          %p317 = pneg %p95
        $region18: #{_forward_padded.1} parent=11 // pred_check_branch
          %319 = sbr.rel (%p317) target = $region20
        $region19: #{_forward_padded.1} parent=11 // pred_region
          %s321 = ssub.s32 16, 16
          %322 = vsyncadd [#allocation6], %s321
          %s324 = sshll.u32 [#allocation5], 4
          %s325 = int_to_ptr.vmem [resolvable:$true] %s324
          %327 = dma.hbm_to_vmem [thread:$0]  %s2, 16, %s325, [#allocation6]
        $region20: #{_forward_padded.1} parent=11 // pred_fallthru
          _
        // Predicated region
        $region21: #{_forward_padded.1} parent=11 // pred_check
          %p328 = pneg %p116
        $region22: #{_forward_padded.1} parent=11 // pred_check_branch
          %330 = sbr.rel (%p328) target = $region24
        $region23: #{_forward_padded.1} parent=11 // pred_region
          %s332 = ssub.s32 16, 16
          %333 = vsyncadd [#allocation6], %s332
          %s335 = sshll.u32 [#allocation7], 4
          %s336 = int_to_ptr.vmem [resolvable:$true] %s335
          %338 = dma.hbm_to_vmem [thread:$0]  %s3, 16, %s336, [#allocation6]
        $region24: #{_forward_padded.1} parent=11 // pred_fallthru
          _
        // Predicated region
        $region25: #{_forward_padded.1} parent=11 // pred_check
          %p339 = pneg %p137
        $region26: #{_forward_padded.1} parent=11 // pred_check_branch
          %341 = sbr.rel (%p339) target = $region28
        $region27: #{_forward_padded.1} parent=11 // pred_region
          %s343 = ssub.s32 16, 16
          %344 = vsyncadd [#allocation9], %s343
          %s346 = sshll.u32 [#allocation8], 4
          %s347 = int_to_ptr.vmem [resolvable:$true] %s346
          %349 = dma.hbm_to_vmem [thread:$0]  %s4, 16, %s347, [#allocation9]
        $region28: #{_forward_padded.1} parent=11 // pred_fallthru
          _
        // Predicated region
        $region29: #{_forward_padded.1} parent=11 // pred_check
          %p350 = pneg %p158
        $region30: #{_forward_padded.1} parent=11 // pred_check_branch
          %352 = sbr.rel (%p350) target = $region32
        $region31: #{_forward_padded.1} parent=11 // pred_region
          %s354 = ssub.s32 16, 16
          %355 = vsyncadd [#allocation9], %s354
          %s357 = sshll.u32 [#allocation10], 4
          %s358 = int_to_ptr.vmem [resolvable:$true] %s357
          %360 = dma.hbm_to_vmem [thread:$0]  %s5, 16, %s358, [#allocation9]
        $region32: #{_forward_padded.1} parent=11 // pred_fallthru
          _
      $region12: #{_forward_padded.1} parent=5 // pred_fallthru
        _
      %p361 = scmp.lt.s32.totalorder %s27, 8
      // Predicated region
      $region33: #{_forward_padded.1} parent=5 // pred_check
        %p362 = pneg %p361
      $region34: #{_forward_padded.1} parent=5 // pred_check_branch
        %364 = sbr.rel (%p362) target = $region36
      $region35: #{_forward_padded.1} parent=5 // pred_region
        // Predicated region
        $region37: #{_forward_padded.1} parent=35 // pred_check
          %p365 = pneg %p47
        $region38: #{_forward_padded.1} parent=35 // pred_check_branch
          %367 = sbr.rel (%p365) target = $region40
        $region39: #{_forward_padded.1} parent=35 // pred_region
          %p368 = scmp.lt.s32.totalorder %s27, 7
          %s369 = scalar_select %p368, %s27, 7
          %s370 = scalar_lea.vmem %s0, %s369
        $region40: #{_forward_padded.1} parent=35 // pred_fallthru
          _
      $region36: #{_forward_padded.1} parent=5 // pred_fallthru
        _
      %p371 = scmp.le.s32.totalorder 1, %s27
      %p372 = scmp.lt.s32.totalorder %s27, 9
      %p373 = pnand %p371, %p372
      %p374 = pneg %p373
      // Predicated region
      $region41: #{_forward_padded.1} parent=5 // pred_check
        _
      $region42: #{_forward_padded.1} parent=5 // pred_check_branch
        %376 = sbr.rel (%p373) target = $region44
      $region43: #{_forward_padded.1} parent=5 // pred_region
        %s377 = ssub.s32 %s27, 1
        // Predicated region
        $region45: #{_forward_padded.1} parent=43 // pred_check
          %p378 = pneg %p74
        $region46: #{_forward_padded.1} parent=43 // pred_check_branch
          %380 = sbr.rel (%p378) target = $region48
        $region47: #{_forward_padded.1} parent=43 // pred_region
          %381 = dma.done [#allocation3], 4096
        $region48: #{_forward_padded.1} parent=43 // pred_fallthru
          _
        // Predicated region
        $region49: #{_forward_padded.1} parent=43 // pred_check
          %p382 = pneg %p95
        $region50: #{_forward_padded.1} parent=43 // pred_check_branch
          %384 = sbr.rel (%p382) target = $region52
        $region51: #{_forward_padded.1} parent=43 // pred_region
          %385 = dma.done [#allocation6], 16
        $region52: #{_forward_padded.1} parent=43 // pred_fallthru
          _
        // Predicated region
        $region53: #{_forward_padded.1} parent=43 // pred_check
          %p386 = pneg %p116
        $region54: #{_forward_padded.1} parent=43 // pred_check_branch
          %388 = sbr.rel (%p386) target = $region56
        $region55: #{_forward_padded.1} parent=43 // pred_region
          %389 = dma.done [#allocation6], 16
        $region56: #{_forward_padded.1} parent=43 // pred_fallthru
          _
        // Predicated region
        $region57: #{_forward_padded.1} parent=43 // pred_check
          %p390 = pneg %p137
        $region58: #{_forward_padded.1} parent=43 // pred_check_branch
          %392 = sbr.rel (%p390) target = $region60
        $region59: #{_forward_padded.1} parent=43 // pred_region
          %393 = dma.done [#allocation9], 16
        $region60: #{_forward_padded.1} parent=43 // pred_fallthru
          _
        // Predicated region
        $region61: #{_forward_padded.1} parent=43 // pred_check
          %p394 = pneg %p158
        $region62: #{_forward_padded.1} parent=43 // pred_check_branch
          %396 = sbr.rel (%p394) target = $region64
        $region63: #{_forward_padded.1} parent=43 // pred_region
          %397 = dma.done [#allocation9], 16
        $region64: #{_forward_padded.1} parent=43 // pred_fallthru
          _
        %p398 = scmp.lt.s32.totalorder %s32, 7
        %s399 = scalar_select %p398, %s32, 7
        %s400 = scalar_lea.vmem %s0, %s399
        %p401 = pneg %p53
        %p402 = pneg %p50
        %p403 = pneg %p74
        %p404 = pneg %p71
        %p405 = pneg %p95
        %p406 = pneg %p92
        %p407 = pneg %p116
        %p408 = pneg %p113
        %p409 = pneg %p137
        %p410 = pneg %p134
        %p411 = pneg %p158
        %p412 = pneg %p155
        %p413 = pneg %p184
        %p414 = pneg %p181
        %s415 = sand.u32 %s171, 1
        %s416 = scalar_lea.sflag [#allocation4], %s415
        %s417 = sand.u32 %s171, 1
        %s418 = scalar_lea.vmem [#allocation11], %s417
        %p419 = pneg %p205
        %p420 = pneg %p202
        %p421 = pneg %p226
        %p422 = pneg %p223
        %p423 = pneg %p247
        %p424 = pneg %p244
        %p425 = pneg %p268
        %p426 = pneg %p265
        %p427 = pneg %p289
        %p428 = pneg %p286
        %p429 = scmp.lt.s32.totalorder %s32, 7
        %s430 = scalar_select %p429, %s32, 7
        %s431 = scalar_lea.vmem %s0, %s430
        %p432 = scmp.eq.s32.totalorder %s32, 0
        // Predicated region
        $region65: #{_forward_padded.1} parent=43 // pred_check
          %p433 = pneg %p432
        $region66: #{_forward_padded.1} parent=43 // pred_check_branch
          %435 = sbr.rel (%p433) target = $region68
        $region67: #{_forward_padded.1} parent=43 // pred_region
          %v436 = vld [vmem:[#allocation5] sm:$0x1]
          %437 = vst [vmem:[#allocation14] sm:$0x1] %v436
          %v438 = vld [vmem:[#allocation7] sm:$0x1]
          %439 = vst [vmem:[#allocation15] sm:$0x1] %v438
          %v440 = vld [vmem:[#allocation8] sm:$0x1]
          %441 = vst [vmem:[#allocation17] sm:$0x1] %v440
          %v442 = vld [vmem:[#allocation10] sm:$0x1]
          %443 = vst [vmem:[#allocation18] sm:$0x1] %v442
          %444 = vst [vmem:[#allocation12] sm:$0xff] 0.0
          %445 = vst [vmem:[#allocation12 + $0x8] sm:$0xff] 0.0
          %446 = vst [vmem:[#allocation12 + $0x10] sm:$0xff] 0.0
          %447 = vst [vmem:[#allocation12 + $0x18] sm:$0xff] 0.0
          %448 = vst [vmem:[#allocation12 + $0x20] sm:$0xff] 0.0
          %449 = vst [vmem:[#allocation12 + $0x28] sm:$0xff] 0.0
          %450 = vst [vmem:[#allocation12 + $0x30] sm:$0xff] 0.0
          %451 = vst [vmem:[#allocation12 + $0x38] sm:$0xff] 0.0
          %452 = vst [vmem:[#allocation12 + $0x40] sm:$0xff] 0.0
          %453 = vst [vmem:[#allocation12 + $0x48] sm:$0xff] 0.0
          %454 = vst [vmem:[#allocation12 + $0x50] sm:$0xff] 0.0
          %455 = vst [vmem:[#allocation12 + $0x58] sm:$0xff] 0.0
          %456 = vst [vmem:[#allocation12 + $0x60] sm:$0xff] 0.0
          %457 = vst [vmem:[#allocation12 + $0x68] sm:$0xff] 0.0
          %458 = vst [vmem:[#allocation12 + $0x70] sm:$0xff] 0.0
          %459 = vst [vmem:[#allocation12 + $0x78] sm:$0xff] 0.0
          %460 = vst [vmem:[#allocation12 + $0x80] sm:$0xff] 0.0
          %461 = vst [vmem:[#allocation12 + $0x88] sm:$0xff] 0.0
          %462 = vst [vmem:[#allocation12 + $0x90] sm:$0xff] 0.0
          %463 = vst [vmem:[#allocation12 + $0x98] sm:$0xff] 0.0
          %464 = vst [vmem:[#allocation12 + $0xa0] sm:$0xff] 0.0
          %465 = vst [vmem:[#allocation12 + $0xa8] sm:$0xff] 0.0
          %466 = vst [vmem:[#allocation12 + $0xb0] sm:$0xff] 0.0
          %467 = vst [vmem:[#allocation12 + $0xb8] sm:$0xff] 0.0
          %468 = vst [vmem:[#allocation12 + $0xc0] sm:$0xff] 0.0
          %469 = vst [vmem:[#allocation12 + $0xc8] sm:$0xff] 0.0
          %470 = vst [vmem:[#allocation12 + $0xd0] sm:$0xff] 0.0
          %471 = vst [vmem:[#allocation12 + $0xd8] sm:$0xff] 0.0
          %472 = vst [vmem:[#allocation12 + $0xe0] sm:$0xff] 0.0
          %473 = vst [vmem:[#allocation12 + $0xe8] sm:$0xff] 0.0
          %474 = vst [vmem:[#allocation12 + $0xf0] sm:$0xff] 0.0
          %475 = vst [vmem:[#allocation12 + $0xf8] sm:$0xff] 0.0
        $region68: #{_forward_padded.1} parent=43 // pred_fallthru
          _
        %v476 = vld [vmem:[%s431] sm:$0x1]
        %v477 = vld [vmem:[#allocation15] sm:$0x1]
        %v478 = vld [vmem:[#allocation2] sm:$0xff]
        %v479 = vld [vmem:[#allocation2 + $0x8] sm:$0xff]
        %v480 = vld [vmem:[#allocation2 + $0x10] sm:$0xff]
        %v481 = vld [vmem:[#allocation2 + $0x18] sm:$0xff]
        %v482 = vld [vmem:[#allocation2 + $0x20] sm:$0xff]
        %v483 = vld [vmem:[#allocation2 + $0x28] sm:$0xff]
        %v484 = vld [vmem:[#allocation2 + $0x30] sm:$0xff]
        %v485 = vld [vmem:[#allocation2 + $0x38] sm:$0xff]
        %v486 = vld [vmem:[#allocation2 + $0x40] sm:$0xff]
        %v487 = vld [vmem:[#allocation2 + $0x48] sm:$0xff]
        %v488 = vld [vmem:[#allocation2 + $0x50] sm:$0xff]
        %v489 = vld [vmem:[#allocation2 + $0x58] sm:$0xff]
        %v490 = vld [vmem:[#allocation2 + $0x60] sm:$0xff]
        %v491 = vld [vmem:[#allocation2 + $0x68] sm:$0xff]
        %v492 = vld [vmem:[#allocation2 + $0x70] sm:$0xff]
        %v493 = vld [vmem:[#allocation2 + $0x78] sm:$0xff]
        %v494 = vld [vmem:[#allocation2 + $0x80] sm:$0xff]
        %v495 = vld [vmem:[#allocation2 + $0x88] sm:$0xff]
        %v496 = vld [vmem:[#allocation2 + $0x90] sm:$0xff]
        %v497 = vld [vmem:[#allocation2 + $0x98] sm:$0xff]
        %v498 = vld [vmem:[#allocation2 + $0xa0] sm:$0xff]
        %v499 = vld [vmem:[#allocation2 + $0xa8] sm:$0xff]
        %v500 = vld [vmem:[#allocation2 + $0xb0] sm:$0xff]
        %v501 = vld [vmem:[#allocation2 + $0xb8] sm:$0xff]
        %v502 = vld [vmem:[#allocation2 + $0xc0] sm:$0xff]
        %v503 = vld [vmem:[#allocation2 + $0xc8] sm:$0xff]
        %v504 = vld [vmem:[#allocation2 + $0xd0] sm:$0xff]
        %v505 = vld [vmem:[#allocation2 + $0xd8] sm:$0xff]
        %v506 = vld [vmem:[#allocation2 + $0xe0] sm:$0xff]
        %v507 = vld [vmem:[#allocation2 + $0xe8] sm:$0xff]
        %v508 = vld [vmem:[#allocation2 + $0xf0] sm:$0xff]
        %v509 = vld [vmem:[#allocation2 + $0xf8] sm:$0xff]
        %510 = vmatprep.subr.mxu0 0.0
        %511 = vmatpush1.msra.mxu0 %v478
        %512 = vmatprep.subr.mxu0 0.0
        %513 = vmatpush1.msra.mxu0 %v479
        %514 = vmatprep.subr.mxu0 0.0
        %515 = vmatpush1.msra.mxu0 %v480
        %516 = vmatprep.subr.mxu0 0.0
        %517 = vmatpush1.msra.mxu0 %v481
        %518 = vmatprep.subr.mxu0 0.0
        %519 = vmatpush1.msra.mxu0 %v482
        %520 = vmatprep.subr.mxu0 0.0
        %521 = vmatpush1.msra.mxu0 %v483
        %522 = vmatprep.subr.mxu0 0.0
        %523 = vmatpush1.msra.mxu0 %v484
        %524 = vmatprep.subr.mxu0 0.0
        %525 = vmatpush1.msra.mxu0 %v485
        %526 = vmatprep.subr.mxu0 0.0
        %527 = vmatpush1.msra.mxu0 %v486
        %528 = vmatprep.subr.mxu0 0.0
        %529 = vmatpush1.msra.mxu0 %v487
        %530 = vmatprep.subr.mxu0 0.0
        %531 = vmatpush1.msra.mxu0 %v488
        %532 = vmatprep.subr.mxu0 0.0
        %533 = vmatpush1.msra.mxu0 %v489
        %534 = vmatprep.subr.mxu0 0.0
        %535 = vmatpush1.msra.mxu0 %v490
        %536 = vmatprep.subr.mxu0 0.0
        %537 = vmatpush1.msra.mxu0 %v491
        %538 = vmatprep.subr.mxu0 0.0
        %539 = vmatpush1.msra.mxu0 %v492
        %540 = vmatprep.subr.mxu0 0.0
        %541 = vmatpush1.msra.mxu0 %v493
        %542 = vmatprep.subr.mxu0 0.0
        %543 = vmatpush1.msra.mxu0 %v494
        %544 = vmatprep.subr.mxu0 0.0
        %545 = vmatpush1.msra.mxu0 %v495
        %546 = vmatprep.subr.mxu0 0.0
        %547 = vmatpush1.msra.mxu0 %v496
        %548 = vmatprep.subr.mxu0 0.0
        %549 = vmatpush1.msra.mxu0 %v497
        %550 = vmatprep.subr.mxu0 0.0
        %551 = vmatpush1.msra.mxu0 %v498
        %552 = vmatprep.subr.mxu0 0.0
        %553 = vmatpush1.msra.mxu0 %v499
        %554 = vmatprep.subr.mxu0 0.0
        %555 = vmatpush1.msra.mxu0 %v500
        %556 = vmatprep.subr.mxu0 0.0
        %557 = vmatpush1.msra.mxu0 %v501
        %558 = vmatprep.subr.mxu0 0.0
        %559 = vmatpush1.msra.mxu0 %v502
        %560 = vmatprep.subr.mxu0 0.0
        %561 = vmatpush1.msra.mxu0 %v503
        %562 = vmatprep.subr.mxu0 0.0
        %563 = vmatpush1.msra.mxu0 %v504
        %564 = vmatprep.subr.mxu0 0.0
        %565 = vmatpush1.msra.mxu0 %v505
        %566 = vmatprep.subr.mxu0 0.0
        %567 = vmatpush1.msra.mxu0 %v506
        %568 = vmatprep.subr.mxu0 0.0
        %569 = vmatpush1.msra.mxu0 %v507
        %570 = vmatprep.subr.mxu0 0.0
        %571 = vmatpush1.msra.mxu0 %v508
        %572 = vmatprep.subr.mxu0 0.0
        %573 = vmatpush1.msra.mxu0 %v509
        %574 = vmatprep.mubr.f32.mxu0 %v477
        %575 = vmatmul.mubr.f32.gmra.mrb[0].mxu0 %v476
        %v576 = vpop.f32.mrb[0].mxu0
        %v577 = vadd.f32 0.0, %v576
        %v578 = vpop.f32.mrb[0].mxu0
        %579 = vdwg.mxu0
        %v580 = vld [vmem:[#allocation14] sm:$0x1]
        %v581 = vadd.f32 %v580, %v577
        %v582 = vsub.f32 %v581, 0.5
        %vm583 = vcmp.gt.f32.partialorder %v582, 0.0
        %v584 = vsel %vm583, 1, 0
        %v585 = vcvt.s32.f32 %v584
        %v586 = vsub.f32 1.0, %v585
        %v587 = vmul.f32 %v581, %v586
        %588 = vst [vmem:[#allocation14] sm:$0x1] %v587
        %589 = vst [vmem:[%s418] sm:$0x1] %v585
        %590 = vst [vmem:[#allocation15] sm:$0x1] %v585
        %v591 = vld [vmem:[#allocation17] sm:$0x1]
        %v592 = vmul.f32 %v591, 0.99
        %v593 = vadd.f32 %v592, %v476
        %v594 = vld [vmem:[#allocation18] sm:$0x1]
        %v595 = vmul.f32 %v594, 0.99
        %v596 = vadd.f32 %v595, %v477
        %597 = vst [vmem:[#allocation17] sm:$0x1] %v593
        %598 = vst [vmem:[#allocation18] sm:$0x1] %v596
        %v599 = vld [vmem:[#allocation12] sm:$0xff]
        %v600 = vld [vmem:[#allocation12 + $0x8] sm:$0xff]
        %v601 = vld [vmem:[#allocation12 + $0x10] sm:$0xff]
        %v602 = vld [vmem:[#allocation12 + $0x18] sm:$0xff]
        %v603 = vld [vmem:[#allocation12 + $0x20] sm:$0xff]
        %v604 = vld [vmem:[#allocation12 + $0x28] sm:$0xff]
        %v605 = vld [vmem:[#allocation12 + $0x30] sm:$0xff]
        %v606 = vld [vmem:[#allocation12 + $0x38] sm:$0xff]
        %v607 = vld [vmem:[#allocation12 + $0x40] sm:$0xff]
        %v608 = vld [vmem:[#allocation12 + $0x48] sm:$0xff]
        %v609 = vld [vmem:[#allocation12 + $0x50] sm:$0xff]
        %v610 = vld [vmem:[#allocation12 + $0x58] sm:$0xff]
        %v611 = vld [vmem:[#allocation12 + $0x60] sm:$0xff]
        %v612 = vld [vmem:[#allocation12 + $0x68] sm:$0xff]
        %v613 = vld [vmem:[#allocation12 + $0x70] sm:$0xff]
        %v614 = vld [vmem:[#allocation12 + $0x78] sm:$0xff]
        %v615 = vld [vmem:[#allocation12 + $0x80] sm:$0xff]
        %v616 = vld [vmem:[#allocation12 + $0x88] sm:$0xff]
        %v617 = vld [vmem:[#allocation12 + $0x90] sm:$0xff]
        %v618 = vld [vmem:[#allocation12 + $0x98] sm:$0xff]
        %v619 = vld [vmem:[#allocation12 + $0xa0] sm:$0xff]
        %v620 = vld [vmem:[#allocation12 + $0xa8] sm:$0xff]
        %v621 = vld [vmem:[#allocation12 + $0xb0] sm:$0xff]
        %v622 = vld [vmem:[#allocation12 + $0xb8] sm:$0xff]
        %v623 = vld [vmem:[#allocation12 + $0xc0] sm:$0xff]
        %v624 = vld [vmem:[#allocation12 + $0xc8] sm:$0xff]
        %v625 = vld [vmem:[#allocation12 + $0xd0] sm:$0xff]
        %v626 = vld [vmem:[#allocation12 + $0xd8] sm:$0xff]
        %v627 = vld [vmem:[#allocation12 + $0xe0] sm:$0xff]
        %v628 = vld [vmem:[#allocation12 + $0xe8] sm:$0xff]
        %v629 = vld [vmem:[#allocation12 + $0xf0] sm:$0xff]
        %v630 = vld [vmem:[#allocation12 + $0xf8] sm:$0xff]
        %631 = vxpose.xlu0.b32.start [1/16] %v593, 128
        %632 = vxpose.xlu0.b32.cont [2/16] 0.0, 128
        %633 = vxpose.xlu0.b32.cont [3/16] 0.0, 128
        %634 = vxpose.xlu0.b32.cont [4/16] 0.0, 128
        %635 = vxpose.xlu0.b32.cont [5/16] 0.0, 128
        %636 = vxpose.xlu0.b32.cont [6/16] 0.0, 128
        %637 = vxpose.xlu0.b32.cont [7/16] 0.0, 128
        %638 = vxpose.xlu0.b32.cont [8/16] 0.0, 128
        %639 = vxpose.xlu0.b32.cont [9/16] 0.0, 128
        %640 = vxpose.xlu0.b32.cont [10/16] 0.0, 128
        %641 = vxpose.xlu0.b32.cont [11/16] 0.0, 128
        %642 = vxpose.xlu0.b32.cont [12/16] 0.0, 128
        %643 = vxpose.xlu0.b32.cont [13/16] 0.0, 128
        %644 = vxpose.xlu0.b32.cont [14/16] 0.0, 128
        %645 = vxpose.xlu0.b32.cont [15/16] 0.0, 128
        %646 = vxpose.xlu0.b32.end [16/16] 0.0, 128
        %v647 = vpop.trf.xlu0
        %v648 = vpop.trf.xlu0
        %v649 = vpop.trf.xlu0
        %v650 = vpop.trf.xlu0
        %v651 = vpop.trf.xlu0
        %v652 = vpop.trf.xlu0
        %v653 = vpop.trf.xlu0
        %v654 = vpop.trf.xlu0
        %v655 = vpop.trf.xlu0
        %v656 = vpop.trf.xlu0
        %v657 = vpop.trf.xlu0
        %v658 = vpop.trf.xlu0
        %v659 = vpop.trf.xlu0
        %v660 = vpop.trf.xlu0
        %v661 = vpop.trf.xlu0
        %v662 = vpop.trf.xlu0
        %663 = vxpose.xlu0.b32.start [1/16] %v596, 128
        %664 = vxpose.xlu0.b32.cont [2/16] 0.0, 128
        %665 = vxpose.xlu0.b32.cont [3/16] 0.0, 128
        %666 = vxpose.xlu0.b32.cont [4/16] 0.0, 128
        %667 = vxpose.xlu0.b32.cont [5/16] 0.0, 128
        %668 = vxpose.xlu0.b32.cont [6/16] 0.0, 128
        %669 = vxpose.xlu0.b32.cont [7/16] 0.0, 128
        %670 = vxpose.xlu0.b32.cont [8/16] 0.0, 128
        %671 = vxpose.xlu0.b32.cont [9/16] 0.0, 128
        %672 = vxpose.xlu0.b32.cont [10/16] 0.0, 128
        %673 = vxpose.xlu0.b32.cont [11/16] 0.0, 128
        %674 = vxpose.xlu0.b32.cont [12/16] 0.0, 128
        %675 = vxpose.xlu0.b32.cont [13/16] 0.0, 128
        %676 = vxpose.xlu0.b32.cont [14/16] 0.0, 128
        %677 = vxpose.xlu0.b32.cont [15/16] 0.0, 128
        %678 = vxpose.xlu0.b32.end [16/16] 0.0, 128
        %v679 = vpop.trf.xlu0
        %v680 = vpop.trf.xlu0
        %v681 = vpop.trf.xlu0
        %v682 = vpop.trf.xlu0
        %v683 = vpop.trf.xlu0
        %v684 = vpop.trf.xlu0
        %v685 = vpop.trf.xlu0
        %v686 = vpop.trf.xlu0
        %v687 = vpop.trf.xlu0
        %v688 = vpop.trf.xlu0
        %v689 = vpop.trf.xlu0
        %v690 = vpop.trf.xlu0
        %v691 = vpop.trf.xlu0
        %v692 = vpop.trf.xlu0
        %v693 = vpop.trf.xlu0
        %v694 = vpop.trf.xlu0
        %vm695 = vcmask 7168
        %v697 = vsel %vm695, %v647, 0
        %v700 = vsel %vm695, %v648, 0
        %v703 = vsel %vm695, %v649, 0
        %v706 = vsel %vm695, %v650, 0
        %v709 = vsel %vm695, %v651, 0
        %v712 = vsel %vm695, %v652, 0
        %v715 = vsel %vm695, %v653, 0
        %v718 = vsel %vm695, %v654, 0
        %v721 = vsel %vm695, %v655, 0
        %v724 = vsel %vm695, %v656, 0
        %v727 = vsel %vm695, %v657, 0
        %v730 = vsel %vm695, %v658, 0
        %v733 = vsel %vm695, %v659, 0
        %v736 = vsel %vm695, %v660, 0
        %v739 = vsel %vm695, %v661, 0
        %v742 = vsel %vm695, %v662, 0
        %v745 = vsel %vm695, %v679, 0
        %v748 = vsel %vm695, %v680, 0
        %v751 = vsel %vm695, %v681, 0
        %v754 = vsel %vm695, %v682, 0
        %v757 = vsel %vm695, %v683, 0
        %v760 = vsel %vm695, %v684, 0
        %v763 = vsel %vm695, %v685, 0
        %v766 = vsel %vm695, %v686, 0
        %v769 = vsel %vm695, %v687, 0
        %v772 = vsel %vm695, %v688, 0
        %v775 = vsel %vm695, %v689, 0
        %v778 = vsel %vm695, %v690, 0
        %v781 = vsel %vm695, %v691, 0
        %v784 = vsel %vm695, %v692, 0
        %v787 = vsel %vm695, %v693, 0
        %v790 = vsel %vm695, %v694, 0
        %vm792 = vcmask 1040384
        %v794 = vsel %vm792, %v585, 0
        %796 = vmatprep.subr.mxu0 0.0
        %797 = vmatpush1.msra.mxu0 %v794
        %798 = vmatprep.subr.mxu0 0.0
        %799 = vmatpush1.msra.mxu0 0.0
        %800 = vmatprep.subr.mxu0 0.0
        %801 = vmatpush1.msra.mxu0 0.0
        %802 = vmatprep.subr.mxu0 0.0
        %803 = vmatpush1.msra.mxu0 0.0
        %804 = vmatprep.subr.mxu0 0.0
        %805 = vmatpush1.msra.mxu0 0.0
        %806 = vmatprep.subr.mxu0 0.0
        %807 = vmatpush1.msra.mxu0 0.0
        %808 = vmatprep.subr.mxu0 0.0
        %809 = vmatpush1.msra.mxu0 0.0
        %810 = vmatprep.subr.mxu0 0.0
        %811 = vmatpush1.msra.mxu0 0.0
        %812 = vmatprep.subr.mxu0 0.0
        %813 = vmatpush1.msra.mxu0 0.0
        %814 = vmatprep.subr.mxu0 0.0
        %815 = vmatpush1.msra.mxu0 0.0
        %816 = vmatprep.subr.mxu0 0.0
        %817 = vmatpush1.msra.mxu0 0.0
        %818 = vmatprep.subr.mxu0 0.0
        %819 = vmatpush1.msra.mxu0 0.0
        %820 = vmatprep.subr.mxu0 0.0
        %821 = vmatpush1.msra.mxu0 0.0
        %822 = vmatprep.subr.mxu0 0.0
        %823 = vmatpush1.msra.mxu0 0.0
        %824 = vmatprep.subr.mxu0 0.0
        %825 = vmatpush1.msra.mxu0 0.0
        %826 = vmatprep.subr.mxu0 0.0
        %827 = vmatpush1.msra.mxu0 0.0
        %828 = vmatprep.subr.mxu0 0.0
        %829 = vmatpush1.msra.mxu0 0.0
        %830 = vmatprep.subr.mxu0 0.0
        %831 = vmatpush1.msra.mxu0 0.0
        %832 = vmatprep.subr.mxu0 0.0
        %833 = vmatpush1.msra.mxu0 0.0
        %834 = vmatprep.subr.mxu0 0.0
        %835 = vmatpush1.msra.mxu0 0.0
        %836 = vmatprep.subr.mxu0 0.0
        %837 = vmatpush1.msra.mxu0 0.0
        %838 = vmatprep.subr.mxu0 0.0
        %839 = vmatpush1.msra.mxu0 0.0
        %840 = vmatprep.subr.mxu0 0.0
        %841 = vmatpush1.msra.mxu0 0.0
        %842 = vmatprep.subr.mxu0 0.0
        %843 = vmatpush1.msra.mxu0 0.0
        %844 = vmatprep.subr.mxu0 0.0
        %845 = vmatpush1.msra.mxu0 0.0
        %846 = vmatprep.subr.mxu0 0.0
        %847 = vmatpush1.msra.mxu0 0.0
        %848 = vmatprep.subr.mxu0 0.0
        %849 = vmatpush1.msra.mxu0 0.0
        %850 = vmatprep.subr.mxu0 0.0
        %851 = vmatpush1.msra.mxu0 0.0
        %852 = vmatprep.subr.mxu0 0.0
        %853 = vmatpush1.msra.mxu0 0.0
        %854 = vmatprep.subr.mxu0 0.0
        %855 = vmatpush1.msra.mxu0 0.0
        %856 = vmatprep.subr.mxu0 0.0
        %857 = vmatpush1.msra.mxu0 0.0
        %858 = vmatprep.subr.mxu0 0.0
        %859 = vmatpush1.msra.mxu0 0.0
        %860 = vmatprep.mubr.f32.mxu0 0.0
        %861 = vmatmul.mubr.f32.gmra.mrb[0].mxu0 %v697
        %v862 = vpop.f32.mrb[0].mxu0
        %v863 = vadd.f32 0.0, %v862
        %v864 = vpop.f32.mrb[0].mxu0
        %865 = vmatprep.mubr.f32.mxu0 0.0
        %866 = vmatmul.mubr.f32.gmra.mrb[0].mxu0 %v700
        %v867 = vpop.f32.mrb[0].mxu0
        %v868 = vadd.f32 0.0, %v867
        %v869 = vpop.f32.mrb[0].mxu0
        %870 = vmatprep.mubr.f32.mxu0 0.0
        %871 = vmatmul.mubr.f32.gmra.mrb[0].mxu0 %v703
        %v872 = vpop.f32.mrb[0].mxu0
        %v873 = vadd.f32 0.0, %v872
        %v874 = vpop.f32.mrb[0].mxu0
        %875 = vmatprep.mubr.f32.mxu0 0.0
        %876 = vmatmul.mubr.f32.gmra.mrb[0].mxu0 %v706
        %v877 = vpop.f32.mrb[0].mxu0
        %v878 = vadd.f32 0.0, %v877
        %v879 = vpop.f32.mrb[0].mxu0
        %880 = vmatprep.mubr.f32.mxu0 0.0
        %881 = vmatmul.mubr.f32.gmra.mrb[0].mxu0 %v709
        %v882 = vpop.f32.mrb[0].mxu0
        %v883 = vadd.f32 0.0, %v882
        %v884 = vpop.f32.mrb[0].mxu0
        %885 = vmatprep.mubr.f32.mxu0 0.0
        %886 = vmatmul.mubr.f32.gmra.mrb[0].mxu0 %v712
        %v887 = vpop.f32.mrb[0].mxu0
        %v888 = vadd.f32 0.0, %v887
        %v889 = vpop.f32.mrb[0].mxu0
        %890 = vmatprep.mubr.f32.mxu0 0.0
        %891 = vmatmul.mubr.f32.gmra.mrb[0].mxu0 %v715
        %v892 = vpop.f32.mrb[0].mxu0
        %v893 = vadd.f32 0.0, %v892
        %v894 = vpop.f32.mrb[0].mxu0
        %895 = vmatprep.mubr.f32.mxu0 0.0
        %896 = vmatmul.mubr.f32.gmra.mrb[0].mxu0 %v718
        %v897 = vpop.f32.mrb[0].mxu0
        %v898 = vadd.f32 0.0, %v897
        %v899 = vpop.f32.mrb[0].mxu0
        %900 = vmatprep.mubr.f32.mxu0 0.0
        %901 = vmatmul.mubr.f32.gmra.mrb[0].mxu0 %v721
        %v902 = vpop.f32.mrb[0].mxu0
        %v903 = vadd.f32 0.0, %v902
        %v904 = vpop.f32.mrb[0].mxu0
        %905 = vmatprep.mubr.f32.mxu0 0.0
        %906 = vmatmul.mubr.f32.gmra.mrb[0].mxu0 %v724
        %v907 = vpop.f32.mrb[0].mxu0
        %v908 = vadd.f32 0.0, %v907
        %v909 = vpop.f32.mrb[0].mxu0
        %910 = vmatprep.mubr.f32.mxu0 0.0
        %911 = vmatmul.mubr.f32.gmra.mrb[0].mxu0 %v727
        %v912 = vpop.f32.mrb[0].mxu0
        %v913 = vadd.f32 0.0, %v912
        %v914 = vpop.f32.mrb[0].mxu0
        %915 = vmatprep.mubr.f32.mxu0 0.0
        %916 = vmatmul.mubr.f32.gmra.mrb[0].mxu0 %v730
        %v917 = vpop.f32.mrb[0].mxu0
        %v918 = vadd.f32 0.0, %v917
        %v919 = vpop.f32.mrb[0].mxu0
        %920 = vmatprep.mubr.f32.mxu0 0.0
        %921 = vmatmul.mubr.f32.gmra.mrb[0].mxu0 %v733
        %v922 = vpop.f32.mrb[0].mxu0
        %v923 = vadd.f32 0.0, %v922
        %v924 = vpop.f32.mrb[0].mxu0
        %925 = vmatprep.mubr.f32.mxu0 0.0
        %926 = vmatmul.mubr.f32.gmra.mrb[0].mxu0 %v736
        %v927 = vpop.f32.mrb[0].mxu0
        %v928 = vadd.f32 0.0, %v927
        %v929 = vpop.f32.mrb[0].mxu0
        %930 = vmatprep.mubr.f32.mxu0 0.0
        %931 = vmatmul.mubr.f32.gmra.mrb[0].mxu0 %v739
        %v932 = vpop.f32.mrb[0].mxu0
        %v933 = vadd.f32 0.0, %v932
        %v934 = vpop.f32.mrb[0].mxu0
        %935 = vmatprep.mubr.f32.mxu0 0.0
        %936 = vmatmul.mubr.f32.gmra.mrb[0].mxu0 %v742
        %v937 = vpop.f32.mrb[0].mxu0
        %v938 = vadd.f32 0.0, %v937
        %v939 = vpop.f32.mrb[0].mxu0
        %940 = vmatprep.mubr.f32.mxu0 0.0
        %941 = vmatmul.mubr.f32.gmra.mrb[0].mxu0 %v745
        %v942 = vpop.f32.mrb[0].mxu0
        %v943 = vadd.f32 0.0, %v942
        %v944 = vpop.f32.mrb[0].mxu0
        %945 = vmatprep.mubr.f32.mxu0 0.0
        %946 = vmatmul.mubr.f32.gmra.mrb[0].mxu0 %v748
        %v947 = vpop.f32.mrb[0].mxu0
        %v948 = vadd.f32 0.0, %v947
        %v949 = vpop.f32.mrb[0].mxu0
        %950 = vmatprep.mubr.f32.mxu0 0.0
        %951 = vmatmul.mubr.f32.gmra.mrb[0].mxu0 %v751
        %v952 = vpop.f32.mrb[0].mxu0
        %v953 = vadd.f32 0.0, %v952
        %v954 = vpop.f32.mrb[0].mxu0
        %955 = vmatprep.mubr.f32.mxu0 0.0
        %956 = vmatmul.mubr.f32.gmra.mrb[0].mxu0 %v754
        %v957 = vpop.f32.mrb[0].mxu0
        %v958 = vadd.f32 0.0, %v957
        %v959 = vpop.f32.mrb[0].mxu0
        %960 = vmatprep.mubr.f32.mxu0 0.0
        %961 = vmatmul.mubr.f32.gmra.mrb[0].mxu0 %v757
        %v962 = vpop.f32.mrb[0].mxu0
        %v963 = vadd.f32 0.0, %v962
        %v964 = vpop.f32.mrb[0].mxu0
        %965 = vmatprep.mubr.f32.mxu0 0.0
        %966 = vmatmul.mubr.f32.gmra.mrb[0].mxu0 %v760
        %v967 = vpop.f32.mrb[0].mxu0
        %v968 = vadd.f32 0.0, %v967
        %v969 = vpop.f32.mrb[0].mxu0
        %970 = vmatprep.mubr.f32.mxu0 0.0
        %971 = vmatmul.mubr.f32.gmra.mrb[0].mxu0 %v763
        %v972 = vpop.f32.mrb[0].mxu0
        %v973 = vadd.f32 0.0, %v972
        %v974 = vpop.f32.mrb[0].mxu0
        %975 = vmatprep.mubr.f32.mxu0 0.0
        %976 = vmatmul.mubr.f32.gmra.mrb[0].mxu0 %v766
        %v977 = vpop.f32.mrb[0].mxu0
        %v978 = vadd.f32 0.0, %v977
        %v979 = vpop.f32.mrb[0].mxu0
        %980 = vmatprep.mubr.f32.mxu0 0.0
        %981 = vmatmul.mubr.f32.gmra.mrb[0].mxu0 %v769
        %v982 = vpop.f32.mrb[0].mxu0
        %v983 = vadd.f32 0.0, %v982
        %v984 = vpop.f32.mrb[0].mxu0
        %985 = vmatprep.mubr.f32.mxu0 0.0
        %986 = vmatmul.mubr.f32.gmra.mrb[0].mxu0 %v772
        %v987 = vpop.f32.mrb[0].mxu0
        %v988 = vadd.f32 0.0, %v987
        %v989 = vpop.f32.mrb[0].mxu0
        %990 = vmatprep.mubr.f32.mxu0 0.0
        %991 = vmatmul.mubr.f32.gmra.mrb[0].mxu0 %v775
        %v992 = vpop.f32.mrb[0].mxu0
        %v993 = vadd.f32 0.0, %v992
        %v994 = vpop.f32.mrb[0].mxu0
        %995 = vmatprep.mubr.f32.mxu0 0.0
        %996 = vmatmul.mubr.f32.gmra.mrb[0].mxu0 %v778
        %v997 = vpop.f32.mrb[0].mxu0
        %v998 = vadd.f32 0.0, %v997
        %v999 = vpop.f32.mrb[0].mxu0
        %1000 = vmatprep.mubr.f32.mxu0 0.0
        %1001 = vmatmul.mubr.f32.gmra.mrb[0].mxu0 %v781
        %v1002 = vpop.f32.mrb[0].mxu0
        %v1003 = vadd.f32 0.0, %v1002
        %v1004 = vpop.f32.mrb[0].mxu0
        %1005 = vmatprep.mubr.f32.mxu0 0.0
        %1006 = vmatmul.mubr.f32.gmra.mrb[0].mxu0 %v784
        %v1007 = vpop.f32.mrb[0].mxu0
        %v1008 = vadd.f32 0.0, %v1007
        %v1009 = vpop.f32.mrb[0].mxu0
        %1010 = vmatprep.mubr.f32.mxu0 0.0
        %1011 = vmatmul.mubr.f32.gmra.mrb[0].mxu0 %v787
        %v1012 = vpop.f32.mrb[0].mxu0
        %v1013 = vadd.f32 0.0, %v1012
        %v1014 = vpop.f32.mrb[0].mxu0
        %1015 = vmatprep.mubr.f32.mxu0 0.0
        %1016 = vmatmul.mubr.f32.gmra.mrb[0].mxu0 %v790
        %v1017 = vpop.f32.mrb[0].mxu0
        %v1018 = vadd.f32 0.0, %v1017
        %v1019 = vpop.f32.mrb[0].mxu0
        %1020 = vdwg.mxu0
        %v1021 = vadd.f32 %v599, %v863
        %v1022 = vadd.f32 %v600, %v868
        %v1023 = vadd.f32 %v601, %v873
        %v1024 = vadd.f32 %v602, %v878
        %v1025 = vadd.f32 %v603, %v883
        %v1026 = vadd.f32 %v604, %v888
        %v1027 = vadd.f32 %v605, %v893
        %v1028 = vadd.f32 %v606, %v898
        %v1029 = vadd.f32 %v607, %v903
        %v1030 = vadd.f32 %v608, %v908
        %v1031 = vadd.f32 %v609, %v913
        %v1032 = vadd.f32 %v610, %v918
        %v1033 = vadd.f32 %v611, %v923
        %v1034 = vadd.f32 %v612, %v928
        %v1035 = vadd.f32 %v613, %v933
        %v1036 = vadd.f32 %v614, %v938
        %v1037 = vadd.f32 %v615, %v943
        %v1038 = vadd.f32 %v616, %v948
        %v1039 = vadd.f32 %v617, %v953
        %v1040 = vadd.f32 %v618, %v958
        %v1041 = vadd.f32 %v619, %v963
        %v1042 = vadd.f32 %v620, %v968
        %v1043 = vadd.f32 %v621, %v973
        %v1044 = vadd.f32 %v622, %v978
        %v1045 = vadd.f32 %v623, %v983
        %v1046 = vadd.f32 %v624, %v988
        %v1047 = vadd.f32 %v625, %v993
        %v1048 = vadd.f32 %v626, %v998
        %v1049 = vadd.f32 %v627, %v1003
        %v1050 = vadd.f32 %v628, %v1008
        %v1051 = vadd.f32 %v629, %v1013
        %v1052 = vadd.f32 %v630, %v1018
        %1053 = vst [vmem:[#allocation12] sm:$0xff] %v1021
        %1054 = vst [vmem:[#allocation12 + $0x8] sm:$0xff] %v1022
        %1055 = vst [vmem:[#allocation12 + $0x10] sm:$0xff] %v1023
        %1056 = vst [vmem:[#allocation12 + $0x18] sm:$0xff] %v1024
        %1057 = vst [vmem:[#allocation12 + $0x20] sm:$0xff] %v1025
        %1058 = vst [vmem:[#allocation12 + $0x28] sm:$0xff] %v1026
        %1059 = vst [vmem:[#allocation12 + $0x30] sm:$0xff] %v1027
        %1060 = vst [vmem:[#allocation12 + $0x38] sm:$0xff] %v1028
        %1061 = vst [vmem:[#allocation12 + $0x40] sm:$0xff] %v1029
        %1062 = vst [vmem:[#allocation12 + $0x48] sm:$0xff] %v1030
        %1063 = vst [vmem:[#allocation12 + $0x50] sm:$0xff] %v1031
        %1064 = vst [vmem:[#allocation12 + $0x58] sm:$0xff] %v1032
        %1065 = vst [vmem:[#allocation12 + $0x60] sm:$0xff] %v1033
        %1066 = vst [vmem:[#allocation12 + $0x68] sm:$0xff] %v1034
        %1067 = vst [vmem:[#allocation12 + $0x70] sm:$0xff] %v1035
        %1068 = vst [vmem:[#allocation12 + $0x78] sm:$0xff] %v1036
        %1069 = vst [vmem:[#allocation12 + $0x80] sm:$0xff] %v1037
        %1070 = vst [vmem:[#allocation12 + $0x88] sm:$0xff] %v1038
        %1071 = vst [vmem:[#allocation12 + $0x90] sm:$0xff] %v1039
        %1072 = vst [vmem:[#allocation12 + $0x98] sm:$0xff] %v1040
        %1073 = vst [vmem:[#allocation12 + $0xa0] sm:$0xff] %v1041
        %1074 = vst [vmem:[#allocation12 + $0xa8] sm:$0xff] %v1042
        %1075 = vst [vmem:[#allocation12 + $0xb0] sm:$0xff] %v1043
        %1076 = vst [vmem:[#allocation12 + $0xb8] sm:$0xff] %v1044
        %1077 = vst [vmem:[#allocation12 + $0xc0] sm:$0xff] %v1045
        %1078 = vst [vmem:[#allocation12 + $0xc8] sm:$0xff] %v1046
        %1079 = vst [vmem:[#allocation12 + $0xd0] sm:$0xff] %v1047
        %1080 = vst [vmem:[#allocation12 + $0xd8] sm:$0xff] %v1048
        %1081 = vst [vmem:[#allocation12 + $0xe0] sm:$0xff] %v1049
        %1082 = vst [vmem:[#allocation12 + $0xe8] sm:$0xff] %v1050
        %1083 = vst [vmem:[#allocation12 + $0xf0] sm:$0xff] %v1051
        %1084 = vst [vmem:[#allocation12 + $0xf8] sm:$0xff] %v1052
        %s1085 = sand.u32 %s171, 1
        %s1086 = scalar_lea.sflag [#allocation4], %s1085
        %s1087 = sand.u32 %s171, 1
        %s1088 = scalar_lea.vmem [#allocation11], %s1087
        // Predicated region
        $region69: #{_forward_padded.1} parent=43 // pred_check
          %p1089 = pneg %p181
        $region70: #{_forward_padded.1} parent=43 // pred_check_branch
          %1091 = sbr.rel (%p1089) target = $region72
        $region71: #{_forward_padded.1} parent=43 // pred_region
          %s1093 = ssub.s32 16, 16
          %1094 = vsyncadd %s1086, %s1093
          %s1095 = smul.addr %s32, 16
          %s1096 = scalar_lea.hbm %s6, %s1095
          %s1098 = sshll.u32 %s1088, 4
          %s1099 = int_to_ptr.vmem [resolvable:$true] %s1098
          %1101 = dma.vmem_to_hbm [thread:$0]  %s1099, 16, %s1096, %s1086
        $region72: #{_forward_padded.1} parent=43 // pred_fallthru
          _
        // Predicated region
        $region73: #{_forward_padded.1} parent=43 // pred_check
          %p1102 = pneg %p202
        $region74: #{_forward_padded.1} parent=43 // pred_check_branch
          %1104 = sbr.rel (%p1102) target = $region76
        $region75: #{_forward_padded.1} parent=43 // pred_region
          %s1106 = ssub.s32 4096, 4096
          %1107 = vsyncadd [#allocation13], %s1106
          %s1108 = sshll.u32 [#allocation12], 4
          %s1109 = int_to_ptr.vmem [resolvable:$true] %s1108
          %1114 = dma.vmem_to_hbm [thread:$0]  %s1109, 4096, %s7, [#allocation13], 128, 128, 8
        $region76: #{_forward_padded.1} parent=43 // pred_fallthru
          _
        // Predicated region
        $region77: #{_forward_padded.1} parent=43 // pred_check
          %p1115 = pneg %p223
        $region78: #{_forward_padded.1} parent=43 // pred_check_branch
          %1117 = sbr.rel (%p1115) target = $region80
        $region79: #{_forward_padded.1} parent=43 // pred_region
          %s1119 = ssub.s32 16, 16
          %1120 = vsyncadd [#allocation13], %s1119
          %s1122 = sshll.u32 [#allocation14], 4
          %s1123 = int_to_ptr.vmem [resolvable:$true] %s1122
          %1125 = dma.vmem_to_hbm [thread:$0]  %s1123, 16, %s8, [#allocation13]
        $region80: #{_forward_padded.1} parent=43 // pred_fallthru
          _
        // Predicated region
        $region81: #{_forward_padded.1} parent=43 // pred_check
          %p1126 = pneg %p244
        $region82: #{_forward_padded.1} parent=43 // pred_check_branch
          %1128 = sbr.rel (%p1126) target = $region84
        $region83: #{_forward_padded.1} parent=43 // pred_region
          %s1130 = ssub.s32 16, 16
          %1131 = vsyncadd [#allocation16], %s1130
          %s1133 = sshll.u32 [#allocation15], 4
          %s1134 = int_to_ptr.vmem [resolvable:$true] %s1133
          %1136 = dma.vmem_to_hbm [thread:$0]  %s1134, 16, %s9, [#allocation16]
        $region84: #{_forward_padded.1} parent=43 // pred_fallthru
          _
        // Predicated region
        $region85: #{_forward_padded.1} parent=43 // pred_check
          %p1137 = pneg %p265
        $region86: #{_forward_padded.1} parent=43 // pred_check_branch
          %1139 = sbr.rel (%p1137) target = $region88
        $region87: #{_forward_padded.1} parent=43 // pred_region
          %s1141 = ssub.s32 16, 16
          %1142 = vsyncadd [#allocation16], %s1141
          %s1144 = sshll.u32 [#allocation17], 4
          %s1145 = int_to_ptr.vmem [resolvable:$true] %s1144
          %1147 = dma.vmem_to_hbm [thread:$0]  %s1145, 16, %s10, [#allocation16]
        $region88: #{_forward_padded.1} parent=43 // pred_fallthru
          _
        // Predicated region
        $region89: #{_forward_padded.1} parent=43 // pred_check
          %p1148 = pneg %p286
        $region90: #{_forward_padded.1} parent=43 // pred_check_branch
          %1150 = sbr.rel (%p1148) target = $region92
        $region91: #{_forward_padded.1} parent=43 // pred_region
          %s1152 = ssub.s32 16, 16
          %1153 = vsyncadd [#allocation19], %s1152
          %s1155 = sshll.u32 [#allocation18], 4
          %s1156 = int_to_ptr.vmem [resolvable:$true] %s1155
          %1158 = dma.vmem_to_hbm [thread:$0]  %s1156, 16, %s11, [#allocation19]
        $region92: #{_forward_padded.1} parent=43 // pred_fallthru
          _
        // Predicated region
        $region93: #{_forward_padded.1} parent=43 // pred_check
          %p1159 = pneg %p202
        $region94: #{_forward_padded.1} parent=43 // pred_check_branch
          %1161 = sbr.rel (%p1159) target = $region96
        $region95: #{_forward_padded.1} parent=43 // pred_region
          %1162 = dma.done [#allocation13], 4096
        $region96: #{_forward_padded.1} parent=43 // pred_fallthru
          _
        // Predicated region
        $region97: #{_forward_padded.1} parent=43 // pred_check
          %p1163 = pneg %p223
        $region98: #{_forward_padded.1} parent=43 // pred_check_branch
          %1165 = sbr.rel (%p1163) target = $region100
        $region99: #{_forward_padded.1} parent=43 // pred_region
          %1166 = dma.done [#allocation13], 16
        $region100: #{_forward_padded.1} parent=43 // pred_fallthru
          _
        // Predicated region
        $region101: #{_forward_padded.1} parent=43 // pred_check
          %p1167 = pneg %p244
        $region102: #{_forward_padded.1} parent=43 // pred_check_branch
          %1169 = sbr.rel (%p1167) target = $region104
        $region103: #{_forward_padded.1} parent=43 // pred_region
          %1170 = dma.done [#allocation16], 16
        $region104: #{_forward_padded.1} parent=43 // pred_fallthru
          _
        // Predicated region
        $region105: #{_forward_padded.1} parent=43 // pred_check
          %p1171 = pneg %p265
        $region106: #{_forward_padded.1} parent=43 // pred_check_branch
          %1173 = sbr.rel (%p1171) target = $region108
        $region107: #{_forward_padded.1} parent=43 // pred_region
          %1174 = dma.done [#allocation16], 16
        $region108: #{_forward_padded.1} parent=43 // pred_fallthru
          _
        // Predicated region
        $region109: #{_forward_padded.1} parent=43 // pred_check
          %p1175 = pneg %p286
        $region110: #{_forward_padded.1} parent=43 // pred_check_branch
          %1177 = sbr.rel (%p1175) target = $region112
        $region111: #{_forward_padded.1} parent=43 // pred_region
          %1178 = dma.done [#allocation19], 16
        $region112: #{_forward_padded.1} parent=43 // pred_fallthru
          _
      $region44: #{_forward_padded.1} parent=5 // pred_fallthru
        _
      %p1179 = scmp.le.s32.totalorder 2, %s27
      // Predicated region
      $region113: #{_forward_padded.1} parent=5 // pred_check
        %p1180 = pneg %p1179
      $region114: #{_forward_padded.1} parent=5 // pred_check_branch
        %1182 = sbr.rel (%p1180) target = $region116
      $region115: #{_forward_padded.1} parent=5 // pred_region
        %s1183 = ssub.s32 %s27, 2
        // Predicated region
        $region117: #{_forward_padded.1} parent=115 // pred_check
          %p1184 = pneg %p187
        $region118: #{_forward_padded.1} parent=115 // pred_check_branch
          %1186 = sbr.rel (%p1184) target = $region120
        $region119: #{_forward_padded.1} parent=115 // pred_region
          %s1187 = sand.u32 %s172, 1
          %s1188 = scalar_lea.sflag [#allocation4], %s1187
          %s1189 = sand.u32 %s172, 1
          %s1190 = scalar_lea.vmem [#allocation11], %s1189
          %1191 = dma.done %s1188, 16
        $region120: #{_forward_padded.1} parent=115 // pred_fallthru
          _
      $region116: #{_forward_padded.1} parent=5 // pred_fallthru
        _
    $region6: #{_forward_padded.1} parent=1 // loop_footer
      %s31 = sadd.s32 1, %s27
    $region7: #{_forward_padded.1} parent=1 // loop_footer_branch
      %26 = sbr.rel target = $region3
    $region8: #{_forward_padded.1} parent=1 // loop_exit
      _
    %1192 = vsyncpa [#allocation3], 1
    %s1193 = scalar_lea.sflag [#allocation3], 1
    %1194 = vsyncpa %s1193, 1
    %1195 = vsyncpa [#allocation6], 1
    %1196 = vsyncpa [#allocation9], 1
    %1197 = vsyncpa [#allocation4], 1
    %s1198 = scalar_lea.sflag [#allocation4], 1
    %1199 = vsyncpa %s1198, 1
    %1200 = vsyncpa [#allocation13], 1
    %1201 = vsyncpa [#allocation16], 1
    %1202 = vsyncpa [#allocation19], 1

</llo_original>
